<compile_context>
chip_gen: v5e
topology: v5e:2x2
jax: 0.10.0
libtpu: 0.0.40
codegen_flags: <defaults>
</compile_context>

<pallas_src>
import functools
import math
import re

import jax
import jax.numpy as jnp
from jax.experimental import pallas as pl
from jax.experimental.pallas import tpu as pltpu


# ------------------------------- kernels ---------------------------------- #

def _distmult_mxu_kernel(b_ref, r_ref, s_ref, o_ref):
    """score[b, n] = sum_d (bcast * rel)[b, d] * stream[b, n, d]  via the MXU.

    b_ref: (tb, 1, D)  broadcast operand (head in 'tail' mode, tail in 'head'
                       mode), native (e.g. bf16) dtype.
    r_ref: (tb, 1, D)  relation, pre-cast to the same dtype.
    s_ref: (tb, tn, D) streamed candidates.
    o_ref: (tb, 1, tn) f32 scores (unit dim squeezed in the wrapper).
    """
    hr = b_ref[...] * r_ref[...]                                   # (tb, 1, D)
    o_ref[...] = jnp.einsum(
        "bqd,bnd->bqn", hr, s_ref[...],
        preferred_element_type=jnp.float32).astype(o_ref.dtype)    # (tb, 1, tn)


def _distmult_elem_kernel(h_ref, r_ref, t_ref, o_ref, *, upcast):
    h, r, t = h_ref[...], r_ref[...], t_ref[...]
    if upcast:  # v5e (no bf16 VPU) or f32 inputs
        h, r, t = (x.astype(jnp.float32) for x in (h, r, t))
    o_ref[...] = jnp.sum(h * r * t, axis=2,
                         dtype=jnp.float32).astype(o_ref.dtype)


def _transe_kernel(h_ref, r_ref, t_ref, o_ref, *, gamma, dist_ord, upcast):
    h, r, t = h_ref[...], r_ref[...], t_ref[...]
    if upcast:
        h, r, t = (x.astype(jnp.float32) for x in (h, r, t))
    d = h + r - t
    if dist_ord == 1:
        nrm = jnp.sum(jnp.abs(d), axis=2, dtype=jnp.float32)
    else:  # dist_ord == 2
        nrm = jnp.sqrt(jnp.sum(d * d, axis=2, dtype=jnp.float32))
    o_ref[...] = (gamma - nrm).astype(o_ref.dtype)


# ---------------------------- hardware / tiling ---------------------------- #

@functools.lru_cache(maxsize=None)
def _chip_info():
    """(generation, usable per-core VMEM bytes).  Conservative on failure."""
    gen = 6
    try:
        kind = jax.devices()[0].device_kind      # e.g. "TPU v5 lite", "TPU v6e"
        m = re.search(r"(\d+)", kind)
        if m:
            gen = int(m.group(1))
    except Exception:
        pass
    try:
        cap = int(pltpu.get_tpu_info().vmem_capacity_bytes)
    except Exception:
        cap = None
    # v7x has 64 MiB *per TensorCore*; clamp in case the query reports the
    # chip-level figure.  Earlier generations have 128 MiB.
    per_core = (64 << 20) if gen >= 7 else (128 << 20)
    if cap is None:
        cap = per_core
    return gen, min(cap, per_core)


def _round_up(x, m):
    return ((x + m - 1) // m) * m


def _select_tiles(B, N, D, in_dtypes, streamed_flags, body_f32_temps, vmem_cap):
    """Pick (tb, tn, est_bytes) for grid=(cdiv(B, tb), cdiv(N, tn)).

    tn is a multiple of 128 with NO divisibility-of-N requirement (ragged last
    blocks are handled by Pallas).  The largest block whose double-buffered
    inputs, outputs and kernel-body temporaries fit in ~45% of VMEM wins.
    """
    budget = int(vmem_cap * 0.45)
    n128 = _round_up(N, 128)

    if B < 8:
        tb_cands = [B]                            # block == full dim (allowed)
    else:
        b8 = _round_up(B, 8)
        tb_cands = sorted({t for t in (32, 16, 8, min(b8, 32)) if t <= b8},
                          reverse=True)
    tn_cands = sorted({t for t in (4096, 2048, 1024, 512, 256, 128, n128)
                       if t <= min(n128, 4096)}, reverse=True)

    def step_bytes(tb, tn):
        b = 0
        for dt, st in zip(in_dtypes, streamed_flags):
            nb = tn if st else 1
            b += 2 * tb * nb * D * jnp.dtype(dt).itemsize  # double-buffered in
        b += 2 * tb * tn * 4                               # double-buffered out
        b += body_f32_temps * tb * tn * D * 4              # in-kernel temps
        b += tb * tn * 4
        return b

    feasible = [(tb, tn) for tn in tn_cands for tb in tb_cands
                if step_bytes(tb, tn) <= budget]
    if feasible:
        tb, tn = max(feasible, key=lambda p: (step_bytes(*p), p[1]))
    else:
        tb, tn = min(tb_cands), min(tn_cands)
    return tb, tn, step_bytes(tb, tn)


def _vmem_limit(est, vmem_cap):
    return int(min(max(est + (8 << 20), 32 << 20), vmem_cap - (8 << 20)))


# -------------------------------- wrapper ---------------------------------- #

class LinkScorerPallas:
    def __init__(self, num_rels, h_dim, link_regularizer_weight, score_type,
                 transe_margin_gamma=1.0, dist_ord=2, seed=0):
        assert score_type in ("transe", "distmult")
        self.num_relations = num_rels
        self.embedding_dim = h_dim
        self.score_type = score_type
        self.transe_margin_gamma = float(transe_margin_gamma)
        self.dist_ord = dist_ord
        self.link_regularizer_weight = link_regularizer_weight
        self._mxu_ok = True  # flips off if this build can't lower the batched matvec
        # deterministic parameter init: uniform(-6/sqrt(D), 6/sqrt(D))
        emb_range = 6.0 / math.sqrt(h_dim)
        self.w_relation = jax.random.uniform(
            jax.random.PRNGKey(seed), (num_rels, h_dim), dtype=jnp.float32,
            minval=-emb_range, maxval=emb_range)
        # TODO(synk): reg_loss()/loss() (negative-adversarial-sampling losses)
        # are training-time utilities, not part of the scoring forward pass.

    # degenerate path (N == 1, 'single' mode): a 1-step grid with a lane-sparse
    # (B, 1) output block would be pure overhead -> plain jnp.
    def _score_jnp(self, h, r, t):
        h, r, t = (x.astype(jnp.float32) for x in (h, r, t))
        if self.score_type == "distmult":
            return jnp.sum(h * r * t, axis=2)
        d = h + r - t
        if self.dist_ord == 1:
            nrm = jnp.sum(jnp.abs(d), axis=2)
        else:
            nrm = jnp.sqrt(jnp.sum(d * d, axis=2))
        return self.transe_margin_gamma - nrm

    def _call_distmult_mxu(self, head, relation, tail, head_streamed, vmem_cap):
        B, _, D = head.shape
        if head_streamed:
            bcast, stream = tail, head     # 'head' mode: candidates are heads
        else:
            bcast, stream = head, tail     # 'tail' mode
        N = stream.shape[1]

        tb, tn, est = _select_tiles(
            B, N, D,
            [bcast.dtype, relation.dtype, stream.dtype],
            [False, False, True],
            body_f32_temps=0, vmem_cap=vmem_cap)

        out = pl.pallas_call(
            _distmult_mxu_kernel,
            out_shape=jax.ShapeDtypeStruct((B, 1, N), jnp.float32),
            grid=(pl.cdiv(B, tb), pl.cdiv(N, tn)),
            in_specs=[
                pl.BlockSpec((tb, 1, D), lambda b, i: (b, 0, 0)),
                pl.BlockSpec((tb, 1, D), lambda b, i: (b, 0, 0)),
                pl.BlockSpec((tb, tn, D), lambda b, i: (b, i, 0)),
            ],
            out_specs=pl.BlockSpec((tb, 1, tn), lambda b, i: (b, 0, i)),
            compiler_params=pltpu.CompilerParams(
                dimension_semantics=("parallel", "parallel"),
                vmem_limit_bytes=_vmem_limit(est, vmem_cap)),
        )(bcast, relation, stream)
        return out.reshape(B, N)

    def _call_elementwise(self, head, relation, tail, head_streamed,
                          tail_streamed, upcast, vmem_cap):
        B, Nh, D = head.shape
        N = max(Nh, tail.shape[1])

        tb, tn, est = _select_tiles(
            B, N, D,
            [head.dtype, relation.dtype, tail.dtype],
            [head_streamed, False, tail_streamed],
            body_f32_temps=2, vmem_cap=vmem_cap)

        def spec(streamed):
            if streamed:
                return pl.BlockSpec((tb, tn, D), lambda b, i: (b, i, 0))
            return pl.BlockSpec((tb, 1, D), lambda b, i: (b, 0, 0))

        if self.score_type == "distmult":
            kernel = functools.partial(_distmult_elem_kernel, upcast=upcast)
        else:
            kernel = functools.partial(_transe_kernel,
                                       gamma=self.transe_margin_gamma,
                                       dist_ord=self.dist_ord, upcast=upcast)

        return pl.pallas_call(
            kernel,
            out_shape=jax.ShapeDtypeStruct((B, N), jnp.float32),
            grid=(pl.cdiv(B, tb), pl.cdiv(N, tn)),
            in_specs=[spec(head_streamed), spec(False), spec(tail_streamed)],
            out_specs=pl.BlockSpec((tb, tn), lambda b, i: (b, i)),
            compiler_params=pltpu.CompilerParams(
                dimension_semantics=("parallel", "parallel"),
                vmem_limit_bytes=_vmem_limit(est, vmem_cap)),
        )(head, relation, tail)

    def __call__(self, head_embs, tail_embs, rel_idx, mode="single"):
        # ---- plain-JAX glue: relation gather + unsqueeze (mirrors torch) ----
        relation = self.w_relation[rel_idx][:, None, :]           # (B, 1, D) f32
        if head_embs.ndim < 3:
            head_embs = head_embs[:, None, :]
        if tail_embs.ndim < 3:
            tail_embs = tail_embs[:, None, :]
        # NOTE: 'head'/'tail'/'single' only change parenthesization in the
        # torch code; the math is identical, so the kernels cover every mode.

        B, Nh, D = head_embs.shape
        _, Nt, _ = tail_embs.shape
        assert D == self.embedding_dim
        N = max(Nh, Nt)
        assert Nh in (1, N) and Nt in (1, N)

        if N == 1:
            return self._score_jnp(head_embs, relation, tail_embs)

        emb_dtype = jnp.promote_types(head_embs.dtype, tail_embs.dtype)
        head_embs = head_embs.astype(emb_dtype)
        tail_embs = tail_embs.astype(emb_dtype)
        itemsize = jnp.dtype(emb_dtype).itemsize

        gen, vmem_cap = _chip_info()
        # Keep sub-f32 data native through the elementwise stage on chips with
        # a bf16 VPU (v6e+); upcast to f32 on v5e and for f32 inputs.
        upcast = (itemsize >= 4) or (gen < 6)

        head_streamed = Nh > 1
        tail_streamed = Nt > 1
        use_mxu = (self.score_type == "distmult" and self._mxu_ok
                   and itemsize <= 2 and head_streamed != tail_streamed)

        if use_mxu:
            try:
                return self._call_distmult_mxu(
                    head_embs, relation.astype(emb_dtype), tail_embs,
                    head_streamed, vmem_cap)
            except Exception:
                # Safety net: if this Mosaic build can't lower the batched
                # (1,D)x(D,tn) matvec, fall back to the elementwise path.
                self._mxu_ok = False

        rel_in = relation if upcast else relation.astype(emb_dtype)
        return self._call_elementwise(head_embs, rel_in, tail_embs,
                                      head_streamed, tail_streamed,
                                      upcast, vmem_cap)


# --------------------------- reference + main ------------------------------ #

def _ref_score(head, rel, tail, score_type, gamma=1.0, dist_ord=2):
    if head.ndim < 3:
        head = head[:, None, :]
    if tail.ndim < 3:
        tail = tail[:, None, :]
    rel = rel[:, None, :]
    head, rel, tail = (x.astype(jnp.float32) for x in (head, rel, tail))
    if score_type == "distmult":
        return jnp.sum(head * rel * tail, axis=2)
    d = head + rel - tail
    if dist_ord == 1:
        nrm = jnp.sum(jnp.abs(d), axis=2)
    else:
        nrm = jnp.sqrt(jnp.sum(d * d, axis=2))
    return gamma - nrm


if __name__ == "__main__":
    key = jax.random.PRNGKey(0)
    B, D, R = 8, 128, 16
    N = 200          # deliberately NOT a multiple of 128: exercises ragged blocks

    k1, k2, k3, k4, k5 = jax.random.split(key, 5)
    head_2d = jax.random.normal(k1, (B, D), dtype=jnp.float32)      # positive heads
    tail_2d = jax.random.normal(k2, (B, D), dtype=jnp.float32)      # positive tails
    tail_nd = jax.random.normal(k3, (B, N, D), dtype=jnp.float32)   # tail candidates
    head_nd = jax.random.normal(k4, (B, N, D), dtype=jnp.float32)   # head candidates
    rel_idx = jax.random.randint(k5, (B,), 0, R)

    bf16 = jnp.bfloat16
    ok = True
    for score_type in ("distmult", "transe"):
        scorer = LinkScorerPallas(num_rels=R, h_dim=D,
                                  link_regularizer_weight=0.01,
                                  score_type=score_type,
                                  transe_margin_gamma=1.0, dist_ord=2)
        rel = scorer.w_relation[rel_idx]
        rel_bf = rel.astype(bf16)

        # 'tail' mode, f32, ragged N -> (B, N)
        out = jax.block_until_ready(scorer(head_2d, tail_nd, rel_idx, mode="tail"))
        ref = _ref_score(head_2d, rel, tail_nd, score_type)
        ok &= (out.shape == (B, N))
        ok &= bool(jnp.allclose(out, ref, atol=1e-4, rtol=1e-4))

        # 'tail' mode, bf16 embeddings (distmult takes the MXU path)
        out = jax.block_until_ready(
            scorer(head_2d.astype(bf16), tail_nd.astype(bf16), rel_idx, mode="tail"))
        ref = _ref_score(head_2d.astype(bf16), rel_bf, tail_nd.astype(bf16), score_type)
        ok &= bool(jnp.allclose(out, ref, atol=5e-2, rtol=5e-2))

        # 'head' mode, bf16 (streamed heads, broadcast tails)
        out = jax.block_until_ready(
            scorer(head_nd.astype(bf16), tail_2d.astype(bf16), rel_idx, mode="head"))
        ref = _ref_score(head_nd.astype(bf16), rel_bf, tail_2d.astype(bf16), score_type)
        ok &= bool(jnp.allclose(out, ref, atol=5e-2, rtol=5e-2))

        # 'single' mode (N == 1 -> jnp fallback), f32
        out = jax.block_until_ready(scorer(head_2d, tail_2d, rel_idx, mode="single"))
        ref = _ref_score(head_2d, rel, tail_2d, score_type)
        ok &= bool(jnp.allclose(out, ref, atol=1e-4, rtol=1e-4))

    print("KERNEL_OK" if ok else "KERNEL_MISMATCH")
</pallas_src>

<mosaic_0001>
module attributes {stable_mosaic.version = 11 : i64} {
  func.func @_distmult_elem_kernel(%arg0: i32, %arg1: i32, %arg2: memref<8x1x128xf32, #tpu.memory_space<vmem>>, %arg3: memref<8x1x128xf32, #tpu.memory_space<vmem>>, %arg4: memref<8x256x128xf32, #tpu.memory_space<vmem>>, %arg5: memref<8x256xf32, #tpu.memory_space<vmem>>) attributes {dimension_semantics = [#tpu.dimension_semantics<parallel>, #tpu.dimension_semantics<parallel>], iteration_bounds = array<i64: 1, 1>, scalar_prefetch = 0 : i64, scratch_operands = 0 : i64, tpu.core_type = #tpu.core_type<tc>, window_params = [{transform_indices = @transform_0, window_bounds = array<i64: 8, 1, 128>}, {transform_indices = @transform_1, window_bounds = array<i64: 8, 1, 128>}, {transform_indices = @transform_2, window_bounds = array<i64: 8, 256, 128>}, {transform_indices = @transform_3, window_bounds = array<i64: 8, 256>}]} {
    %c0 = arith.constant 0 : index
    %c0_0 = arith.constant 0 : index
    %c0_1 = arith.constant 0 : index
    %0 = vector.load %arg2[%c0, %c0_0, %c0_1] : memref<8x1x128xf32, #tpu.memory_space<vmem>>, vector<8x1x128xf32>
    %c0_2 = arith.constant 0 : index
    %c0_3 = arith.constant 0 : index
    %c0_4 = arith.constant 0 : index
    %1 = vector.load %arg3[%c0_2, %c0_3, %c0_4] : memref<8x1x128xf32, #tpu.memory_space<vmem>>, vector<8x1x128xf32>
    %c0_5 = arith.constant 0 : index
    %c0_6 = arith.constant 0 : index
    %c0_7 = arith.constant 0 : index
    %2 = vector.load %arg4[%c0_5, %c0_6, %c0_7] : memref<8x256x128xf32, #tpu.memory_space<vmem>>, vector<8x256x128xf32>
    %3 = arith.mulf %0, %1 : vector<8x1x128xf32>
    %4 = vector.broadcast %3 : vector<8x1x128xf32> to vector<8x256x128xf32>
    %5 = arith.mulf %4, %2 : vector<8x256x128xf32>
    %cst = arith.constant dense<0.000000e+00> : vector<8x256xf32>
    %6 = vector.multi_reduction <add>, %5, %cst [2] : vector<8x256x128xf32> to vector<8x256xf32>
    %c0_8 = arith.constant 0 : index
    %c0_9 = arith.constant 0 : index
    %7 = vector.load %arg5[%c0_8, %c0_9] : memref<8x256xf32, #tpu.memory_space<vmem>>, vector<8x256xf32>
    tpu.vector_store %arg5[%c0_8, %c0_9], %6 {strides = array<i32>} : memref<8x256xf32, #tpu.memory_space<vmem>>, vector<8x256xf32>,
    return
  }
  func.func @transform_0(%arg0: i32, %arg1: i32) -> (i32, i32, i32) {
    %c0_i32 = arith.constant 0 : i32
    %c0_i32_0 = arith.constant 0 : i32
    %c0_i32_1 = arith.constant 0 : i32
    return %arg0, %c0_i32, %c0_i32_0 : i32, i32, i32
  }
  func.func @transform_1(%arg0: i32, %arg1: i32) -> (i32, i32, i32) {
    %c0_i32 = arith.constant 0 : i32
    %c0_i32_0 = arith.constant 0 : i32
    %c0_i32_1 = arith.constant 0 : i32
    return %arg0, %c0_i32, %c0_i32_0 : i32, i32, i32
  }
  func.func @transform_2(%arg0: i32, %arg1: i32) -> (i32, i32, i32) {
    %c0_i32 = arith.constant 0 : i32
    %c0_i32_0 = arith.constant 0 : i32
    return %arg0, %arg1, %c0_i32 : i32, i32, i32
  }
  func.func @transform_3(%arg0: i32, %arg1: i32) -> (i32, i32) {
    %c0_i32 = arith.constant 0 : i32
    return %arg0, %arg1 : i32, i32
  }
}

</mosaic_0001>

<llo_original>
// kernel: tpu_custom_call.1
$region0: #{tpu_custom_call.1}
  #allocation0 [shape = 'u32[]', space=smem, size = 0x4, offset = 0x4, fixed_abs, tag = 'smem constant byte address 0x4 - core index']
  #allocation1 [shape = 'u32[72,128]{1,0:T(1,128)}', space=vmem, size = 0x9000, scoped, tag = 'internal scratch']
  #allocation9 [shape = 's32[]', space=sflag, size = 0x4, offset = 0, fixed_abs, tag = 'sflag constant byte address 0x0 - dummy sync flag']
  %s0 = inlined_call_operand.hbm [shape: f32[8,1,128], index: 0, kind: input, shape index: {}]
  %s1 = inlined_call_operand.hbm [shape: f32[8,1,128], index: 1, kind: input, shape index: {}]
  %s2 = inlined_call_operand.hbm [shape: f32[8,200,128], index: 2, kind: input, shape index: {}]
  %s3 = inlined_call_operand.hbm [shape: f32[8,200], index: 3, kind: output, shape index: {}]
  %s4 = sld [smem:[#allocation0]]
  $region34: #{tpu_custom_call.1} parent=0
    _
  %s6 = ssub.s32 1, %s4
  %s7 = scalar_select 0, %s6, %s4
  $region1: #{tpu_custom_call.1} parent=0
    #allocation2 [shape = 'u8[4096]{0}', space=vmem, size = 0x1000, scoped, tag = 'input window, operand 0, single buffered']
    #allocation3 [shape = 's32[1]{0}', space=sflag, size = 0x4, scoped, tag = 'scoped memory for tpu_custom_call.1']
    #allocation4 [shape = 's32[1]{0}', space=sflag, size = 0x4, scoped, tag = 'scoped memory for tpu_custom_call.1']
    #allocation5 [shape = 'u8[4096]{0}', space=vmem, size = 0x1000, scoped, tag = 'input window, operand 1, single buffered']
    #allocation6 [shape = 's32[1]{0}', space=sflag, size = 0x4, scoped, tag = 'scoped memory for tpu_custom_call.1']
    #allocation7 [shape = 'u8[1048576]{0}', space=vmem, size = 0x100000, scoped, tag = 'input window, operand 2, single buffered']
    #allocation8 [shape = 'u8[8192]{0}', space=vmem, size = 0x2000, scoped, tag = 'output window, operand 0, single buffered']
    %8 = vsyncpa [#allocation3], 0
    %9 = vsyncpa [#allocation6], 0
    %10 = vsyncpa [#allocation4], 0
    // Predicated region
    $region2: #{tpu_custom_call.1} parent=1 // pred_check
      _
    $region3: #{tpu_custom_call.1} parent=1 // pred_check_branch
      %12 = sbr.rel (0) target = $region5
    $region4: #{tpu_custom_call.1} parent=1 // pred_region
      %14 = vsyncadd [#allocation3], 0
      %s15 = sshll.u32 %s0, 4
      %s16 = int_to_ptr.hbm [resolvable:$true] %s15
      %s17 = sshll.u32 [#allocation2], 4
      %s18 = int_to_ptr.vmem [resolvable:$true] %s17
      %23 = dma.hbm_to_vmem [thread:$0]  %s16, 128, %s18, [#allocation3], 16, 16, 1
    $region5: #{tpu_custom_call.1} parent=1 // pred_fallthru
      _
    // Predicated region
    $region6: #{tpu_custom_call.1} parent=1 // pred_check
      _
    $region7: #{tpu_custom_call.1} parent=1 // pred_check_branch
      %25 = sbr.rel (0) target = $region9
    $region8: #{tpu_custom_call.1} parent=1 // pred_region
      %27 = vsyncadd [#allocation6], 0
      %s28 = sshll.u32 %s1, 4
      %s29 = int_to_ptr.hbm [resolvable:$true] %s28
      %s30 = sshll.u32 [#allocation5], 4
      %s31 = int_to_ptr.vmem [resolvable:$true] %s30
      %36 = dma.hbm_to_vmem [thread:$0]  %s29, 128, %s31, [#allocation6], 16, 16, 1
    $region9: #{tpu_custom_call.1} parent=1 // pred_fallthru
      _
    // Predicated region
    $region10: #{tpu_custom_call.1} parent=1 // pred_check
      _
    $region11: #{tpu_custom_call.1} parent=1 // pred_check_branch
      %38 = sbr.rel (0) target = $region13
    $region12: #{tpu_custom_call.1} parent=1 // pred_region
      #allocation10 [shape = 'u32[6]{0}', space=smem, size = 0x18, scoped, tag = 'DMA stride descriptor']
      %40 = vsyncadd [#allocation6], 7168
      %s42 = sshll.u32 1, 14
      %s43 = sxor.u32 4294967295, %s42
      %s45 = sld [smem:[#allocation0]]
      %s46 = sadd.s32 2, %s45
      %s48 = sshll.u32 7, 26
      %s49 = sxor.u32 4294967295, %s48
      %s50 = sand.u32 0, %s49
      %s51 = sshll.u32 %s46, 26
      %s52 = sor.u32 %s50, %s51
      %s53 = sshll.u32 %s2, 4
      %s54 = int_to_ptr.hbm [resolvable:$true] %s53
      %s55 = sshll.u32 [#allocation7], 4
      %s56 = int_to_ptr.vmem [resolvable:$true] %s55
      %62 = sst [smem:[#allocation10]] 3200
      %s63 = scalar_lea.smem [#allocation10], 1
      %64 = sst [smem:[%s63]] 4096
      %s65 = scalar_lea.smem [#allocation10], 2
      %66 = sst [smem:[%s65]] 25
      %s67 = scalar_lea.smem [#allocation10], 3
      %68 = sst [smem:[%s67]] 128
      %s69 = scalar_lea.smem [#allocation10], 4
      %70 = sst [smem:[%s69]] 128
      %s71 = scalar_lea.smem [#allocation10], 5
      %72 = sst [smem:[%s71]] 8
      %74 = dma.general %s54, 25600, %s56, [#allocation6], [#allocation9], [#allocation10], %s52, 0
    $region13: #{tpu_custom_call.1} parent=1 // pred_fallthru
      _
    // Predicated region
    $region14: #{tpu_custom_call.1} parent=1 // pred_check
      _
    $region15: #{tpu_custom_call.1} parent=1 // pred_check_branch
      %76 = sbr.rel (0) target = $region17
    $region16: #{tpu_custom_call.1} parent=1 // pred_region
      %78 = dma.done [#allocation3], 128
    $region17: #{tpu_custom_call.1} parent=1 // pred_fallthru
      _
    // Predicated region
    $region18: #{tpu_custom_call.1} parent=1 // pred_check
      _
    $region19: #{tpu_custom_call.1} parent=1 // pred_check_branch
      %80 = sbr.rel (0) target = $region21
    $region20: #{tpu_custom_call.1} parent=1 // pred_region
      %82 = dma.done [#allocation6], 128
    $region21: #{tpu_custom_call.1} parent=1 // pred_fallthru
      _
    // Predicated region
    $region22: #{tpu_custom_call.1} parent=1 // pred_check
      _
    $region23: #{tpu_custom_call.1} parent=1 // pred_check_branch
      %84 = sbr.rel (0) target = $region25
    $region24: #{tpu_custom_call.1} parent=1 // pred_region
      %86 = dma.done [#allocation6], 32768
    $region25: #{tpu_custom_call.1} parent=1 // pred_fallthru
      _
    %v87 = vld [vmem:[#allocation2] sm:$0x1]
    %v88 = vld [vmem:[#allocation2 + $0x1] sm:$0x1]
    %v89 = vld [vmem:[#allocation2 + $0x2] sm:$0x1]
    %v90 = vld [vmem:[#allocation2 + $0x3] sm:$0x1]
    %v91 = vld [vmem:[#allocation2 + $0x4] sm:$0x1]
    %v92 = vld [vmem:[#allocation2 + $0x5] sm:$0x1]
    %v93 = vld [vmem:[#allocation2 + $0x6] sm:$0x1]
    %v94 = vld [vmem:[#allocation2 + $0x7] sm:$0x1]
    %v95 = vld [vmem:[#allocation5] sm:$0x1]
    %v96 = vld [vmem:[#allocation5 + $0x1] sm:$0x1]
    %v97 = vld [vmem:[#allocation5 + $0x2] sm:$0x1]
    %v98 = vld [vmem:[#allocation5 + $0x3] sm:$0x1]
    %v99 = vld [vmem:[#allocation5 + $0x4] sm:$0x1]
    %v100 = vld [vmem:[#allocation5 + $0x5] sm:$0x1]
    %v101 = vld [vmem:[#allocation5 + $0x6] sm:$0x1]
    %v102 = vld [vmem:[#allocation5 + $0x7] sm:$0x1]
    %v103 = vld [vmem:[#allocation7] sm:$0xff]
    %v104 = vld [vmem:[#allocation7 + $0x8] sm:$0xff]
    %v105 = vld [vmem:[#allocation7 + $0x10] sm:$0xff]
    %v106 = vld [vmem:[#allocation7 + $0x18] sm:$0xff]
    %v107 = vld [vmem:[#allocation7 + $0x20] sm:$0xff]
    %v108 = vld [vmem:[#allocation7 + $0x28] sm:$0xff]
    %v109 = vld [vmem:[#allocation7 + $0x30] sm:$0xff]
    %v110 = vld [vmem:[#allocation7 + $0x38] sm:$0xff]
    %v111 = vld [vmem:[#allocation7 + $0x40] sm:$0xff]
    %v112 = vld [vmem:[#allocation7 + $0x48] sm:$0xff]
    %v113 = vld [vmem:[#allocation7 + $0x50] sm:$0xff]
    %v114 = vld [vmem:[#allocation7 + $0x58] sm:$0xff]
    %v115 = vld [vmem:[#allocation7 + $0x60] sm:$0xff]
    %v116 = vld [vmem:[#allocation7 + $0x68] sm:$0xff]
    %v117 = vld [vmem:[#allocation7 + $0x70] sm:$0xff]
    %v118 = vld [vmem:[#allocation7 + $0x78] sm:$0xff]
    %v119 = vld [vmem:[#allocation7 + $0x80] sm:$0xff]
    %v120 = vld [vmem:[#allocation7 + $0x88] sm:$0xff]
    %v121 = vld [vmem:[#allocation7 + $0x90] sm:$0xff]
    %v122 = vld [vmem:[#allocation7 + $0x98] sm:$0xff]
    %v123 = vld [vmem:[#allocation7 + $0xa0] sm:$0xff]
    %v124 = vld [vmem:[#allocation7 + $0xa8] sm:$0xff]
    %v125 = vld [vmem:[#allocation7 + $0xb0] sm:$0xff]
    %v126 = vld [vmem:[#allocation7 + $0xb8] sm:$0xff]
    %v127 = vld [vmem:[#allocation7 + $0xc0] sm:$0xff]
    %v128 = vld [vmem:[#allocation7 + $0xc8] sm:$0xff]
    %v129 = vld [vmem:[#allocation7 + $0xd0] sm:$0xff]
    %v130 = vld [vmem:[#allocation7 + $0xd8] sm:$0xff]
    %v131 = vld [vmem:[#allocation7 + $0xe0] sm:$0xff]
    %v132 = vld [vmem:[#allocation7 + $0xe8] sm:$0xff]
    %v133 = vld [vmem:[#allocation7 + $0xf0] sm:$0xff]
    %v134 = vld [vmem:[#allocation7 + $0xf8] sm:$0xff]
    %v135 = vld [vmem:[#allocation7 + $0x100] sm:$0xff]
    %v136 = vld [vmem:[#allocation7 + $0x108] sm:$0xff]
    %v137 = vld [vmem:[#allocation7 + $0x110] sm:$0xff]
    %v138 = vld [vmem:[#allocation7 + $0x118] sm:$0xff]
    %v139 = vld [vmem:[#allocation7 + $0x120] sm:$0xff]
    %v140 = vld [vmem:[#allocation7 + $0x128] sm:$0xff]
    %v141 = vld [vmem:[#allocation7 + $0x130] sm:$0xff]
    %v142 = vld [vmem:[#allocation7 + $0x138] sm:$0xff]
    %v143 = vld [vmem:[#allocation7 + $0x140] sm:$0xff]
    %v144 = vld [vmem:[#allocation7 + $0x148] sm:$0xff]
    %v145 = vld [vmem:[#allocation7 + $0x150] sm:$0xff]
    %v146 = vld [vmem:[#allocation7 + $0x158] sm:$0xff]
    %v147 = vld [vmem:[#allocation7 + $0x160] sm:$0xff]
    %v148 = vld [vmem:[#allocation7 + $0x168] sm:$0xff]
    %v149 = vld [vmem:[#allocation7 + $0x170] sm:$0xff]
    %v150 = vld [vmem:[#allocation7 + $0x178] sm:$0xff]
    %v151 = vld [vmem:[#allocation7 + $0x180] sm:$0xff]
    %v152 = vld [vmem:[#allocation7 + $0x188] sm:$0xff]
    %v153 = vld [vmem:[#allocation7 + $0x190] sm:$0xff]
    %v154 = vld [vmem:[#allocation7 + $0x198] sm:$0xff]
    %v155 = vld [vmem:[#allocation7 + $0x1a0] sm:$0xff]
    %v156 = vld [vmem:[#allocation7 + $0x1a8] sm:$0xff]
    %v157 = vld [vmem:[#allocation7 + $0x1b0] sm:$0xff]
    %v158 = vld [vmem:[#allocation7 + $0x1b8] sm:$0xff]
    %v159 = vld [vmem:[#allocation7 + $0x1c0] sm:$0xff]
    %v160 = vld [vmem:[#allocation7 + $0x1c8] sm:$0xff]
    %v161 = vld [vmem:[#allocation7 + $0x1d0] sm:$0xff]
    %v162 = vld [vmem:[#allocation7 + $0x1d8] sm:$0xff]
    %v163 = vld [vmem:[#allocation7 + $0x1e0] sm:$0xff]
    %v164 = vld [vmem:[#allocation7 + $0x1e8] sm:$0xff]
    %v165 = vld [vmem:[#allocation7 + $0x1f0] sm:$0xff]
    %v166 = vld [vmem:[#allocation7 + $0x1f8] sm:$0xff]
    %v167 = vld [vmem:[#allocation7 + $0x200] sm:$0xff]
    %v168 = vld [vmem:[#allocation7 + $0x208] sm:$0xff]
    %v169 = vld [vmem:[#allocation7 + $0x210] sm:$0xff]
    %v170 = vld [vmem:[#allocation7 + $0x218] sm:$0xff]
    %v171 = vld [vmem:[#allocation7 + $0x220] sm:$0xff]
    %v172 = vld [vmem:[#allocation7 + $0x228] sm:$0xff]
    %v173 = vld [vmem:[#allocation7 + $0x230] sm:$0xff]
    %v174 = vld [vmem:[#allocation7 + $0x238] sm:$0xff]
    %v175 = vld [vmem:[#allocation7 + $0x240] sm:$0xff]
    %v176 = vld [vmem:[#allocation7 + $0x248] sm:$0xff]
    %v177 = vld [vmem:[#allocation7 + $0x250] sm:$0xff]
    %v178 = vld [vmem:[#allocation7 + $0x258] sm:$0xff]
    %v179 = vld [vmem:[#allocation7 + $0x260] sm:$0xff]
    %v180 = vld [vmem:[#allocation7 + $0x268] sm:$0xff]
    %v181 = vld [vmem:[#allocation7 + $0x270] sm:$0xff]
    %v182 = vld [vmem:[#allocation7 + $0x278] sm:$0xff]
    %v183 = vld [vmem:[#allocation7 + $0x280] sm:$0xff]
    %v184 = vld [vmem:[#allocation7 + $0x288] sm:$0xff]
    %v185 = vld [vmem:[#allocation7 + $0x290] sm:$0xff]
    %v186 = vld [vmem:[#allocation7 + $0x298] sm:$0xff]
    %v187 = vld [vmem:[#allocation7 + $0x2a0] sm:$0xff]
    %v188 = vld [vmem:[#allocation7 + $0x2a8] sm:$0xff]
    %v189 = vld [vmem:[#allocation7 + $0x2b0] sm:$0xff]
    %v190 = vld [vmem:[#allocation7 + $0x2b8] sm:$0xff]
    %v191 = vld [vmem:[#allocation7 + $0x2c0] sm:$0xff]
    %v192 = vld [vmem:[#allocation7 + $0x2c8] sm:$0xff]
    %v193 = vld [vmem:[#allocation7 + $0x2d0] sm:$0xff]
    %v194 = vld [vmem:[#allocation7 + $0x2d8] sm:$0xff]
    %v195 = vld [vmem:[#allocation7 + $0x2e0] sm:$0xff]
    %v196 = vld [vmem:[#allocation7 + $0x2e8] sm:$0xff]
    %v197 = vld [vmem:[#allocation7 + $0x2f0] sm:$0xff]
    %v198 = vld [vmem:[#allocation7 + $0x2f8] sm:$0xff]
    %v199 = vld [vmem:[#allocation7 + $0x300] sm:$0xff]
    %v200 = vld [vmem:[#allocation7 + $0x308] sm:$0xff]
    %v201 = vld [vmem:[#allocation7 + $0x310] sm:$0xff]
    %v202 = vld [vmem:[#allocation7 + $0x318] sm:$0xff]
    %v203 = vld [vmem:[#allocation7 + $0x320] sm:$0xff]
    %v204 = vld [vmem:[#allocation7 + $0x328] sm:$0xff]
    %v205 = vld [vmem:[#allocation7 + $0x330] sm:$0xff]
    %v206 = vld [vmem:[#allocation7 + $0x338] sm:$0xff]
    %v207 = vld [vmem:[#allocation7 + $0x340] sm:$0xff]
    %v208 = vld [vmem:[#allocation7 + $0x348] sm:$0xff]
    %v209 = vld [vmem:[#allocation7 + $0x350] sm:$0xff]
    %v210 = vld [vmem:[#allocation7 + $0x358] sm:$0xff]
    %v211 = vld [vmem:[#allocation7 + $0x360] sm:$0xff]
    %v212 = vld [vmem:[#allocation7 + $0x368] sm:$0xff]
    %v213 = vld [vmem:[#allocation7 + $0x370] sm:$0xff]
    %v214 = vld [vmem:[#allocation7 + $0x378] sm:$0xff]
    %v215 = vld [vmem:[#allocation7 + $0x380] sm:$0xff]
    %v216 = vld [vmem:[#allocation7 + $0x388] sm:$0xff]
    %v217 = vld [vmem:[#allocation7 + $0x390] sm:$0xff]
    %v218 = vld [vmem:[#allocation7 + $0x398] sm:$0xff]
    %v219 = vld [vmem:[#allocation7 + $0x3a0] sm:$0xff]
    %v220 = vld [vmem:[#allocation7 + $0x3a8] sm:$0xff]
    %v221 = vld [vmem:[#allocation7 + $0x3b0] sm:$0xff]
    %v222 = vld [vmem:[#allocation7 + $0x3b8] sm:$0xff]
    %v223 = vld [vmem:[#allocation7 + $0x3c0] sm:$0xff]
    %v224 = vld [vmem:[#allocation7 + $0x3c8] sm:$0xff]
    %v225 = vld [vmem:[#allocation7 + $0x3d0] sm:$0xff]
    %v226 = vld [vmem:[#allocation7 + $0x3d8] sm:$0xff]
    %v227 = vld [vmem:[#allocation7 + $0x3e0] sm:$0xff]
    %v228 = vld [vmem:[#allocation7 + $0x3e8] sm:$0xff]
    %v229 = vld [vmem:[#allocation7 + $0x3f0] sm:$0xff]
    %v230 = vld [vmem:[#allocation7 + $0x3f8] sm:$0xff]
    %v231 = vld [vmem:[#allocation7 + $0x400] sm:$0xff]
    %v232 = vld [vmem:[#allocation7 + $0x408] sm:$0xff]
    %v233 = vld [vmem:[#allocation7 + $0x410] sm:$0xff]
    %v234 = vld [vmem:[#allocation7 + $0x418] sm:$0xff]
    %v235 = vld [vmem:[#allocation7 + $0x420] sm:$0xff]
    %v236 = vld [vmem:[#allocation7 + $0x428] sm:$0xff]
    %v237 = vld [vmem:[#allocation7 + $0x430] sm:$0xff]
    %v238 = vld [vmem:[#allocation7 + $0x438] sm:$0xff]
    %v239 = vld [vmem:[#allocation7 + $0x440] sm:$0xff]
    %v240 = vld [vmem:[#allocation7 + $0x448] sm:$0xff]
    %v241 = vld [vmem:[#allocation7 + $0x450] sm:$0xff]
    %v242 = vld [vmem:[#allocation7 + $0x458] sm:$0xff]
    %v243 = vld [vmem:[#allocation7 + $0x460] sm:$0xff]
    %v244 = vld [vmem:[#allocation7 + $0x468] sm:$0xff]
    %v245 = vld [vmem:[#allocation7 + $0x470] sm:$0xff]
    %v246 = vld [vmem:[#allocation7 + $0x478] sm:$0xff]
    %v247 = vld [vmem:[#allocation7 + $0x480] sm:$0xff]
    %v248 = vld [vmem:[#allocation7 + $0x488] sm:$0xff]
    %v249 = vld [vmem:[#allocation7 + $0x490] sm:$0xff]
    %v250 = vld [vmem:[#allocation7 + $0x498] sm:$0xff]
    %v251 = vld [vmem:[#allocation7 + $0x4a0] sm:$0xff]
    %v252 = vld [vmem:[#allocation7 + $0x4a8] sm:$0xff]
    %v253 = vld [vmem:[#allocation7 + $0x4b0] sm:$0xff]
    %v254 = vld [vmem:[#allocation7 + $0x4b8] sm:$0xff]
    %v255 = vld [vmem:[#allocation7 + $0x4c0] sm:$0xff]
    %v256 = vld [vmem:[#allocation7 + $0x4c8] sm:$0xff]
    %v257 = vld [vmem:[#allocation7 + $0x4d0] sm:$0xff]
    %v258 = vld [vmem:[#allocation7 + $0x4d8] sm:$0xff]
    %v259 = vld [vmem:[#allocation7 + $0x4e0] sm:$0xff]
    %v260 = vld [vmem:[#allocation7 + $0x4e8] sm:$0xff]
    %v261 = vld [vmem:[#allocation7 + $0x4f0] sm:$0xff]
    %v262 = vld [vmem:[#allocation7 + $0x4f8] sm:$0xff]
    %v263 = vld [vmem:[#allocation7 + $0x500] sm:$0xff]
    %v264 = vld [vmem:[#allocation7 + $0x508] sm:$0xff]
    %v265 = vld [vmem:[#allocation7 + $0x510] sm:$0xff]
    %v266 = vld [vmem:[#allocation7 + $0x518] sm:$0xff]
    %v267 = vld [vmem:[#allocation7 + $0x520] sm:$0xff]
    %v268 = vld [vmem:[#allocation7 + $0x528] sm:$0xff]
    %v269 = vld [vmem:[#allocation7 + $0x530] sm:$0xff]
    %v270 = vld [vmem:[#allocation7 + $0x538] sm:$0xff]
    %v271 = vld [vmem:[#allocation7 + $0x540] sm:$0xff]
    %v272 = vld [vmem:[#allocation7 + $0x548] sm:$0xff]
    %v273 = vld [vmem:[#allocation7 + $0x550] sm:$0xff]
    %v274 = vld [vmem:[#allocation7 + $0x558] sm:$0xff]
    %v275 = vld [vmem:[#allocation7 + $0x560] sm:$0xff]
    %v276 = vld [vmem:[#allocation7 + $0x568] sm:$0xff]
    %v277 = vld [vmem:[#allocation7 + $0x570] sm:$0xff]
    %v278 = vld [vmem:[#allocation7 + $0x578] sm:$0xff]
    %v279 = vld [vmem:[#allocation7 + $0x580] sm:$0xff]
    %v280 = vld [vmem:[#allocation7 + $0x588] sm:$0xff]
    %v281 = vld [vmem:[#allocation7 + $0x590] sm:$0xff]
    %v282 = vld [vmem:[#allocation7 + $0x598] sm:$0xff]
    %v283 = vld [vmem:[#allocation7 + $0x5a0] sm:$0xff]
    %v284 = vld [vmem:[#allocation7 + $0x5a8] sm:$0xff]
    %v285 = vld [vmem:[#allocation7 + $0x5b0] sm:$0xff]
    %v286 = vld [vmem:[#allocation7 + $0x5b8] sm:$0xff]
    %v287 = vld [vmem:[#allocation7 + $0x5c0] sm:$0xff]
    %v288 = vld [vmem:[#allocation7 + $0x5c8] sm:$0xff]
    %v289 = vld [vmem:[#allocation7 + $0x5d0] sm:$0xff]
    %v290 = vld [vmem:[#allocation7 + $0x5d8] sm:$0xff]
    %v291 = vld [vmem:[#allocation7 + $0x5e0] sm:$0xff]
    %v292 = vld [vmem:[#allocation7 + $0x5e8] sm:$0xff]
    %v293 = vld [vmem:[#allocation7 + $0x5f0] sm:$0xff]
    %v294 = vld [vmem:[#allocation7 + $0x5f8] sm:$0xff]
    %v295 = vld [vmem:[#allocation7 + $0x600] sm:$0xff]
    %v296 = vld [vmem:[#allocation7 + $0x608] sm:$0xff]
    %v297 = vld [vmem:[#allocation7 + $0x610] sm:$0xff]
    %v298 = vld [vmem:[#allocation7 + $0x618] sm:$0xff]
    %v299 = vld [vmem:[#allocation7 + $0x620] sm:$0xff]
    %v300 = vld [vmem:[#allocation7 + $0x628] sm:$0xff]
    %v301 = vld [vmem:[#allocation7 + $0x630] sm:$0xff]
    %v302 = vld [vmem:[#allocation7 + $0x638] sm:$0xff]
    %v303 = vld [vmem:[#allocation7 + $0x640] sm:$0xff]
    %v304 = vld [vmem:[#allocation7 + $0x648] sm:$0xff]
    %v305 = vld [vmem:[#allocation7 + $0x650] sm:$0xff]
    %v306 = vld [vmem:[#allocation7 + $0x658] sm:$0xff]
    %v307 = vld [vmem:[#allocation7 + $0x660] sm:$0xff]
    %v308 = vld [vmem:[#allocation7 + $0x668] sm:$0xff]
    %v309 = vld [vmem:[#allocation7 + $0x670] sm:$0xff]
    %v310 = vld [vmem:[#allocation7 + $0x678] sm:$0xff]
    %v311 = vld [vmem:[#allocation7 + $0x680] sm:$0xff]
    %v312 = vld [vmem:[#allocation7 + $0x688] sm:$0xff]
    %v313 = vld [vmem:[#allocation7 + $0x690] sm:$0xff]
    %v314 = vld [vmem:[#allocation7 + $0x698] sm:$0xff]
    %v315 = vld [vmem:[#allocation7 + $0x6a0] sm:$0xff]
    %v316 = vld [vmem:[#allocation7 + $0x6a8] sm:$0xff]
    %v317 = vld [vmem:[#allocation7 + $0x6b0] sm:$0xff]
    %v318 = vld [vmem:[#allocation7 + $0x6b8] sm:$0xff]
    %v319 = vld [vmem:[#allocation7 + $0x6c0] sm:$0xff]
    %v320 = vld [vmem:[#allocation7 + $0x6c8] sm:$0xff]
    %v321 = vld [vmem:[#allocation7 + $0x6d0] sm:$0xff]
    %v322 = vld [vmem:[#allocation7 + $0x6d8] sm:$0xff]
    %v323 = vld [vmem:[#allocation7 + $0x6e0] sm:$0xff]
    %v324 = vld [vmem:[#allocation7 + $0x6e8] sm:$0xff]
    %v325 = vld [vmem:[#allocation7 + $0x6f0] sm:$0xff]
    %v326 = vld [vmem:[#allocation7 + $0x6f8] sm:$0xff]
    %v327 = vld [vmem:[#allocation7 + $0x700] sm:$0xff]
    %v328 = vld [vmem:[#allocation7 + $0x708] sm:$0xff]
    %v329 = vld [vmem:[#allocation7 + $0x710] sm:$0xff]
    %v330 = vld [vmem:[#allocation7 + $0x718] sm:$0xff]
    %v331 = vld [vmem:[#allocation7 + $0x720] sm:$0xff]
    %v332 = vld [vmem:[#allocation7 + $0x728] sm:$0xff]
    %v333 = vld [vmem:[#allocation7 + $0x730] sm:$0xff]
    %v334 = vld [vmem:[#allocation7 + $0x738] sm:$0xff]
    %v335 = vld [vmem:[#allocation7 + $0x740] sm:$0xff]
    %v336 = vld [vmem:[#allocation7 + $0x748] sm:$0xff]
    %v337 = vld [vmem:[#allocation7 + $0x750] sm:$0xff]
    %v338 = vld [vmem:[#allocation7 + $0x758] sm:$0xff]
    %v339 = vld [vmem:[#allocation7 + $0x760] sm:$0xff]
    %v340 = vld [vmem:[#allocation7 + $0x768] sm:$0xff]
    %v341 = vld [vmem:[#allocation7 + $0x770] sm:$0xff]
    %v342 = vld [vmem:[#allocation7 + $0x778] sm:$0xff]
    %v343 = vld [vmem:[#allocation7 + $0x780] sm:$0xff]
    %v344 = vld [vmem:[#allocation7 + $0x788] sm:$0xff]
    %v345 = vld [vmem:[#allocation7 + $0x790] sm:$0xff]
    %v346 = vld [vmem:[#allocation7 + $0x798] sm:$0xff]
    %v347 = vld [vmem:[#allocation7 + $0x7a0] sm:$0xff]
    %v348 = vld [vmem:[#allocation7 + $0x7a8] sm:$0xff]
    %v349 = vld [vmem:[#allocation7 + $0x7b0] sm:$0xff]
    %v350 = vld [vmem:[#allocation7 + $0x7b8] sm:$0xff]
    %v351 = vld [vmem:[#allocation7 + $0x7c0] sm:$0xff]
    %v352 = vld [vmem:[#allocation7 + $0x7c8] sm:$0xff]
    %v353 = vld [vmem:[#allocation7 + $0x7d0] sm:$0xff]
    %v354 = vld [vmem:[#allocation7 + $0x7d8] sm:$0xff]
    %v355 = vld [vmem:[#allocation7 + $0x7e0] sm:$0xff]
    %v356 = vld [vmem:[#allocation7 + $0x7e8] sm:$0xff]
    %v357 = vld [vmem:[#allocation7 + $0x7f0] sm:$0xff]
    %v358 = vld [vmem:[#allocation7 + $0x7f8] sm:$0xff]
    %v359 = vmul.f32 %v87, %v95
    %v360 = vmul.f32 %v88, %v96
    %v361 = vmul.f32 %v89, %v97
    %v362 = vmul.f32 %v90, %v98
    %v363 = vmul.f32 %v91, %v99
    %v364 = vmul.f32 %v92, %v100
    %v365 = vmul.f32 %v93, %v101
    %v366 = vmul.f32 %v94, %v102
    %v375 = vperm.slane %v359, 0
    %v376 = vperm.slane %v360, 0
    %v377 = vperm.slane %v361, 0
    %v378 = vperm.slane %v362, 0
    %v379 = vperm.slane %v363, 0
    %v380 = vperm.slane %v364, 0
    %v381 = vperm.slane %v365, 0
    %v382 = vperm.slane %v366, 0
    %v391 = vmul.f32 %v375, %v103
    %v392 = vmul.f32 %v375, %v104
    %v393 = vmul.f32 %v375, %v105
    %v394 = vmul.f32 %v375, %v106
    %v395 = vmul.f32 %v375, %v107
    %v396 = vmul.f32 %v375, %v108
    %v397 = vmul.f32 %v375, %v109
    %v398 = vmul.f32 %v375, %v110
    %v399 = vmul.f32 %v375, %v111
    %v400 = vmul.f32 %v375, %v112
    %v401 = vmul.f32 %v375, %v113
    %v402 = vmul.f32 %v375, %v114
    %v403 = vmul.f32 %v375, %v115
    %v404 = vmul.f32 %v375, %v116
    %v405 = vmul.f32 %v375, %v117
    %v406 = vmul.f32 %v375, %v118
    %v407 = vmul.f32 %v375, %v119
    %v408 = vmul.f32 %v375, %v120
    %v409 = vmul.f32 %v375, %v121
    %v410 = vmul.f32 %v375, %v122
    %v411 = vmul.f32 %v375, %v123
    %v412 = vmul.f32 %v375, %v124
    %v413 = vmul.f32 %v375, %v125
    %v414 = vmul.f32 %v375, %v126
    %v415 = vmul.f32 %v375, %v127
    %v416 = vmul.f32 %v375, %v128
    %v417 = vmul.f32 %v375, %v129
    %v418 = vmul.f32 %v375, %v130
    %v419 = vmul.f32 %v375, %v131
    %v420 = vmul.f32 %v375, %v132
    %v421 = vmul.f32 %v375, %v133
    %v422 = vmul.f32 %v375, %v134
    %v423 = vmul.f32 %v376, %v135
    %v424 = vmul.f32 %v376, %v136
    %v425 = vmul.f32 %v376, %v137
    %v426 = vmul.f32 %v376, %v138
    %v427 = vmul.f32 %v376, %v139
    %v428 = vmul.f32 %v376, %v140
    %v429 = vmul.f32 %v376, %v141
    %v430 = vmul.f32 %v376, %v142
    %v431 = vmul.f32 %v376, %v143
    %v432 = vmul.f32 %v376, %v144
    %v433 = vmul.f32 %v376, %v145
    %v434 = vmul.f32 %v376, %v146
    %v435 = vmul.f32 %v376, %v147
    %v436 = vmul.f32 %v376, %v148
    %v437 = vmul.f32 %v376, %v149
    %v438 = vmul.f32 %v376, %v150
    %v439 = vmul.f32 %v376, %v151
    %v440 = vmul.f32 %v376, %v152
    %v441 = vmul.f32 %v376, %v153
    %v442 = vmul.f32 %v376, %v154
    %v443 = vmul.f32 %v376, %v155
    %v444 = vmul.f32 %v376, %v156
    %v445 = vmul.f32 %v376, %v157
    %v446 = vmul.f32 %v376, %v158
    %v447 = vmul.f32 %v376, %v159
    %v448 = vmul.f32 %v376, %v160
    %v449 = vmul.f32 %v376, %v161
    %v450 = vmul.f32 %v376, %v162
    %v451 = vmul.f32 %v376, %v163
    %v452 = vmul.f32 %v376, %v164
    %v453 = vmul.f32 %v376, %v165
    %v454 = vmul.f32 %v376, %v166
    %v455 = vmul.f32 %v377, %v167
    %v456 = vmul.f32 %v377, %v168
    %v457 = vmul.f32 %v377, %v169
    %v458 = vmul.f32 %v377, %v170
    %v459 = vmul.f32 %v377, %v171
    %v460 = vmul.f32 %v377, %v172
    %v461 = vmul.f32 %v377, %v173
    %v462 = vmul.f32 %v377, %v174
    %v463 = vmul.f32 %v377, %v175
    %v464 = vmul.f32 %v377, %v176
    %v465 = vmul.f32 %v377, %v177
    %v466 = vmul.f32 %v377, %v178
    %v467 = vmul.f32 %v377, %v179
    %v468 = vmul.f32 %v377, %v180
    %v469 = vmul.f32 %v377, %v181
    %v470 = vmul.f32 %v377, %v182
    %v471 = vmul.f32 %v377, %v183
    %v472 = vmul.f32 %v377, %v184
    %v473 = vmul.f32 %v377, %v185
    %v474 = vmul.f32 %v377, %v186
    %v475 = vmul.f32 %v377, %v187
    %v476 = vmul.f32 %v377, %v188
    %v477 = vmul.f32 %v377, %v189
    %v478 = vmul.f32 %v377, %v190
    %v479 = vmul.f32 %v377, %v191
    %v480 = vmul.f32 %v377, %v192
    %v481 = vmul.f32 %v377, %v193
    %v482 = vmul.f32 %v377, %v194
    %v483 = vmul.f32 %v377, %v195
    %v484 = vmul.f32 %v377, %v196
    %v485 = vmul.f32 %v377, %v197
    %v486 = vmul.f32 %v377, %v198
    %v487 = vmul.f32 %v378, %v199
    %v488 = vmul.f32 %v378, %v200
    %v489 = vmul.f32 %v378, %v201
    %v490 = vmul.f32 %v378, %v202
    %v491 = vmul.f32 %v378, %v203
    %v492 = vmul.f32 %v378, %v204
    %v493 = vmul.f32 %v378, %v205
    %v494 = vmul.f32 %v378, %v206
    %v495 = vmul.f32 %v378, %v207
    %v496 = vmul.f32 %v378, %v208
    %v497 = vmul.f32 %v378, %v209
    %v498 = vmul.f32 %v378, %v210
    %v499 = vmul.f32 %v378, %v211
    %v500 = vmul.f32 %v378, %v212
    %v501 = vmul.f32 %v378, %v213
    %v502 = vmul.f32 %v378, %v214
    %v503 = vmul.f32 %v378, %v215
    %v504 = vmul.f32 %v378, %v216
    %v505 = vmul.f32 %v378, %v217
    %v506 = vmul.f32 %v378, %v218
    %v507 = vmul.f32 %v378, %v219
    %v508 = vmul.f32 %v378, %v220
    %v509 = vmul.f32 %v378, %v221
    %v510 = vmul.f32 %v378, %v222
    %v511 = vmul.f32 %v378, %v223
    %v512 = vmul.f32 %v378, %v224
    %v513 = vmul.f32 %v378, %v225
    %v514 = vmul.f32 %v378, %v226
    %v515 = vmul.f32 %v378, %v227
    %v516 = vmul.f32 %v378, %v228
    %v517 = vmul.f32 %v378, %v229
    %v518 = vmul.f32 %v378, %v230
    %v519 = vmul.f32 %v379, %v231
    %v520 = vmul.f32 %v379, %v232
    %v521 = vmul.f32 %v379, %v233
    %v522 = vmul.f32 %v379, %v234
    %v523 = vmul.f32 %v379, %v235
    %v524 = vmul.f32 %v379, %v236
    %v525 = vmul.f32 %v379, %v237
    %v526 = vmul.f32 %v379, %v238
    %v527 = vmul.f32 %v379, %v239
    %v528 = vmul.f32 %v379, %v240
    %v529 = vmul.f32 %v379, %v241
    %v530 = vmul.f32 %v379, %v242
    %v531 = vmul.f32 %v379, %v243
    %v532 = vmul.f32 %v379, %v244
    %v533 = vmul.f32 %v379, %v245
    %v534 = vmul.f32 %v379, %v246
    %v535 = vmul.f32 %v379, %v247
    %v536 = vmul.f32 %v379, %v248
    %v537 = vmul.f32 %v379, %v249
    %v538 = vmul.f32 %v379, %v250
    %v539 = vmul.f32 %v379, %v251
    %v540 = vmul.f32 %v379, %v252
    %v541 = vmul.f32 %v379, %v253
    %v542 = vmul.f32 %v379, %v254
    %v543 = vmul.f32 %v379, %v255
    %v544 = vmul.f32 %v379, %v256
    %v545 = vmul.f32 %v379, %v257
    %v546 = vmul.f32 %v379, %v258
    %v547 = vmul.f32 %v379, %v259
    %v548 = vmul.f32 %v379, %v260
    %v549 = vmul.f32 %v379, %v261
    %v550 = vmul.f32 %v379, %v262
    %v551 = vmul.f32 %v380, %v263
    %v552 = vmul.f32 %v380, %v264
    %v553 = vmul.f32 %v380, %v265
    %v554 = vmul.f32 %v380, %v266
    %v555 = vmul.f32 %v380, %v267
    %v556 = vmul.f32 %v380, %v268
    %v557 = vmul.f32 %v380, %v269
    %v558 = vmul.f32 %v380, %v270
    %v559 = vmul.f32 %v380, %v271
    %v560 = vmul.f32 %v380, %v272
    %v561 = vmul.f32 %v380, %v273
    %v562 = vmul.f32 %v380, %v274
    %v563 = vmul.f32 %v380, %v275
    %v564 = vmul.f32 %v380, %v276
    %v565 = vmul.f32 %v380, %v277
    %v566 = vmul.f32 %v380, %v278
    %v567 = vmul.f32 %v380, %v279
    %v568 = vmul.f32 %v380, %v280
    %v569 = vmul.f32 %v380, %v281
    %v570 = vmul.f32 %v380, %v282
    %v571 = vmul.f32 %v380, %v283
    %v572 = vmul.f32 %v380, %v284
    %v573 = vmul.f32 %v380, %v285
    %v574 = vmul.f32 %v380, %v286
    %v575 = vmul.f32 %v380, %v287
    %v576 = vmul.f32 %v380, %v288
    %v577 = vmul.f32 %v380, %v289
    %v578 = vmul.f32 %v380, %v290
    %v579 = vmul.f32 %v380, %v291
    %v580 = vmul.f32 %v380, %v292
    %v581 = vmul.f32 %v380, %v293
    %v582 = vmul.f32 %v380, %v294
    %v583 = vmul.f32 %v381, %v295
    %v584 = vmul.f32 %v381, %v296
    %v585 = vmul.f32 %v381, %v297
    %v586 = vmul.f32 %v381, %v298
    %v587 = vmul.f32 %v381, %v299
    %v588 = vmul.f32 %v381, %v300
    %v589 = vmul.f32 %v381, %v301
    %v590 = vmul.f32 %v381, %v302
    %v591 = vmul.f32 %v381, %v303
    %v592 = vmul.f32 %v381, %v304
    %v593 = vmul.f32 %v381, %v305
    %v594 = vmul.f32 %v381, %v306
    %v595 = vmul.f32 %v381, %v307
    %v596 = vmul.f32 %v381, %v308
    %v597 = vmul.f32 %v381, %v309
    %v598 = vmul.f32 %v381, %v310
    %v599 = vmul.f32 %v381, %v311
    %v600 = vmul.f32 %v381, %v312
    %v601 = vmul.f32 %v381, %v313
    %v602 = vmul.f32 %v381, %v314
    %v603 = vmul.f32 %v381, %v315
    %v604 = vmul.f32 %v381, %v316
    %v605 = vmul.f32 %v381, %v317
    %v606 = vmul.f32 %v381, %v318
    %v607 = vmul.f32 %v381, %v319
    %v608 = vmul.f32 %v381, %v320
    %v609 = vmul.f32 %v381, %v321
    %v610 = vmul.f32 %v381, %v322
    %v611 = vmul.f32 %v381, %v323
    %v612 = vmul.f32 %v381, %v324
    %v613 = vmul.f32 %v381, %v325
    %v614 = vmul.f32 %v381, %v326
    %v615 = vmul.f32 %v382, %v327
    %v616 = vmul.f32 %v382, %v328
    %v617 = vmul.f32 %v382, %v329
    %v618 = vmul.f32 %v382, %v330
    %v619 = vmul.f32 %v382, %v331
    %v620 = vmul.f32 %v382, %v332
    %v621 = vmul.f32 %v382, %v333
    %v622 = vmul.f32 %v382, %v334
    %v623 = vmul.f32 %v382, %v335
    %v624 = vmul.f32 %v382, %v336
    %v625 = vmul.f32 %v382, %v337
    %v626 = vmul.f32 %v382, %v338
    %v627 = vmul.f32 %v382, %v339
    %v628 = vmul.f32 %v382, %v340
    %v629 = vmul.f32 %v382, %v341
    %v630 = vmul.f32 %v382, %v342
    %v631 = vmul.f32 %v382, %v343
    %v632 = vmul.f32 %v382, %v344
    %v633 = vmul.f32 %v382, %v345
    %v634 = vmul.f32 %v382, %v346
    %v635 = vmul.f32 %v382, %v347
    %v636 = vmul.f32 %v382, %v348
    %v637 = vmul.f32 %v382, %v349
    %v638 = vmul.f32 %v382, %v350
    %v639 = vmul.f32 %v382, %v351
    %v640 = vmul.f32 %v382, %v352
    %v641 = vmul.f32 %v382, %v353
    %v642 = vmul.f32 %v382, %v354
    %v643 = vmul.f32 %v382, %v355
    %v644 = vmul.f32 %v382, %v356
    %v645 = vmul.f32 %v382, %v357
    %v646 = vmul.f32 %v382, %v358
    %647 = vadd.xlane.f32.xlu0 %v391
    %v648 = vpop.xlane.xlu0 %647
    %649 = vadd.xlane.f32.xlu0 %v392
    %v650 = vpop.xlane.xlu0 %649
    %651 = vadd.xlane.f32.xlu0 %v393
    %v652 = vpop.xlane.xlu0 %651
    %653 = vadd.xlane.f32.xlu0 %v394
    %v654 = vpop.xlane.xlu0 %653
    %655 = vadd.xlane.f32.xlu0 %v395
    %v656 = vpop.xlane.xlu0 %655
    %657 = vadd.xlane.f32.xlu0 %v396
    %v658 = vpop.xlane.xlu0 %657
    %659 = vadd.xlane.f32.xlu0 %v397
    %v660 = vpop.xlane.xlu0 %659
    %661 = vadd.xlane.f32.xlu0 %v398
    %v662 = vpop.xlane.xlu0 %661
    %663 = vadd.xlane.f32.xlu0 %v399
    %v664 = vpop.xlane.xlu0 %663
    %665 = vadd.xlane.f32.xlu0 %v400
    %v666 = vpop.xlane.xlu0 %665
    %667 = vadd.xlane.f32.xlu0 %v401
    %v668 = vpop.xlane.xlu0 %667
    %669 = vadd.xlane.f32.xlu0 %v402
    %v670 = vpop.xlane.xlu0 %669
    %671 = vadd.xlane.f32.xlu0 %v403
    %v672 = vpop.xlane.xlu0 %671
    %673 = vadd.xlane.f32.xlu0 %v404
    %v674 = vpop.xlane.xlu0 %673
    %675 = vadd.xlane.f32.xlu0 %v405
    %v676 = vpop.xlane.xlu0 %675
    %677 = vadd.xlane.f32.xlu0 %v406
    %v678 = vpop.xlane.xlu0 %677
    %679 = vadd.xlane.f32.xlu0 %v407
    %v680 = vpop.xlane.xlu0 %679
    %681 = vadd.xlane.f32.xlu0 %v408
    %v682 = vpop.xlane.xlu0 %681
    %683 = vadd.xlane.f32.xlu0 %v409
    %v684 = vpop.xlane.xlu0 %683
    %685 = vadd.xlane.f32.xlu0 %v410
    %v686 = vpop.xlane.xlu0 %685
    %687 = vadd.xlane.f32.xlu0 %v411
    %v688 = vpop.xlane.xlu0 %687
    %689 = vadd.xlane.f32.xlu0 %v412
    %v690 = vpop.xlane.xlu0 %689
    %691 = vadd.xlane.f32.xlu0 %v413
    %v692 = vpop.xlane.xlu0 %691
    %693 = vadd.xlane.f32.xlu0 %v414
    %v694 = vpop.xlane.xlu0 %693
    %695 = vadd.xlane.f32.xlu0 %v415
    %v696 = vpop.xlane.xlu0 %695
    %697 = vadd.xlane.f32.xlu0 %v416
    %v698 = vpop.xlane.xlu0 %697
    %699 = vadd.xlane.f32.xlu0 %v417
    %v700 = vpop.xlane.xlu0 %699
    %701 = vadd.xlane.f32.xlu0 %v418
    %v702 = vpop.xlane.xlu0 %701
    %703 = vadd.xlane.f32.xlu0 %v419
    %v704 = vpop.xlane.xlu0 %703
    %705 = vadd.xlane.f32.xlu0 %v420
    %v706 = vpop.xlane.xlu0 %705
    %707 = vadd.xlane.f32.xlu0 %v421
    %v708 = vpop.xlane.xlu0 %707
    %709 = vadd.xlane.f32.xlu0 %v422
    %v710 = vpop.xlane.xlu0 %709
    %711 = vadd.xlane.f32.xlu0 %v423
    %v712 = vpop.xlane.xlu0 %711
    %713 = vadd.xlane.f32.xlu0 %v424
    %v714 = vpop.xlane.xlu0 %713
    %715 = vadd.xlane.f32.xlu0 %v425
    %v716 = vpop.xlane.xlu0 %715
    %717 = vadd.xlane.f32.xlu0 %v426
    %v718 = vpop.xlane.xlu0 %717
    %719 = vadd.xlane.f32.xlu0 %v427
    %v720 = vpop.xlane.xlu0 %719
    %721 = vadd.xlane.f32.xlu0 %v428
    %v722 = vpop.xlane.xlu0 %721
    %723 = vadd.xlane.f32.xlu0 %v429
    %v724 = vpop.xlane.xlu0 %723
    %725 = vadd.xlane.f32.xlu0 %v430
    %v726 = vpop.xlane.xlu0 %725
    %727 = vadd.xlane.f32.xlu0 %v431
    %v728 = vpop.xlane.xlu0 %727
    %729 = vadd.xlane.f32.xlu0 %v432
    %v730 = vpop.xlane.xlu0 %729
    %731 = vadd.xlane.f32.xlu0 %v433
    %v732 = vpop.xlane.xlu0 %731
    %733 = vadd.xlane.f32.xlu0 %v434
    %v734 = vpop.xlane.xlu0 %733
    %735 = vadd.xlane.f32.xlu0 %v435
    %v736 = vpop.xlane.xlu0 %735
    %737 = vadd.xlane.f32.xlu0 %v436
    %v738 = vpop.xlane.xlu0 %737
    %739 = vadd.xlane.f32.xlu0 %v437
    %v740 = vpop.xlane.xlu0 %739
    %741 = vadd.xlane.f32.xlu0 %v438
    %v742 = vpop.xlane.xlu0 %741
    %743 = vadd.xlane.f32.xlu0 %v439
    %v744 = vpop.xlane.xlu0 %743
    %745 = vadd.xlane.f32.xlu0 %v440
    %v746 = vpop.xlane.xlu0 %745
    %747 = vadd.xlane.f32.xlu0 %v441
    %v748 = vpop.xlane.xlu0 %747
    %749 = vadd.xlane.f32.xlu0 %v442
    %v750 = vpop.xlane.xlu0 %749
    %751 = vadd.xlane.f32.xlu0 %v443
    %v752 = vpop.xlane.xlu0 %751
    %753 = vadd.xlane.f32.xlu0 %v444
    %v754 = vpop.xlane.xlu0 %753
    %755 = vadd.xlane.f32.xlu0 %v445
    %v756 = vpop.xlane.xlu0 %755
    %757 = vadd.xlane.f32.xlu0 %v446
    %v758 = vpop.xlane.xlu0 %757
    %759 = vadd.xlane.f32.xlu0 %v447
    %v760 = vpop.xlane.xlu0 %759
    %761 = vadd.xlane.f32.xlu0 %v448
    %v762 = vpop.xlane.xlu0 %761
    %763 = vadd.xlane.f32.xlu0 %v449
    %v764 = vpop.xlane.xlu0 %763
    %765 = vadd.xlane.f32.xlu0 %v450
    %v766 = vpop.xlane.xlu0 %765
    %767 = vadd.xlane.f32.xlu0 %v451
    %v768 = vpop.xlane.xlu0 %767
    %769 = vadd.xlane.f32.xlu0 %v452
    %v770 = vpop.xlane.xlu0 %769
    %771 = vadd.xlane.f32.xlu0 %v453
    %v772 = vpop.xlane.xlu0 %771
    %773 = vadd.xlane.f32.xlu0 %v454
    %v774 = vpop.xlane.xlu0 %773
    %775 = vadd.xlane.f32.xlu0 %v455
    %v776 = vpop.xlane.xlu0 %775
    %777 = vadd.xlane.f32.xlu0 %v456
    %v778 = vpop.xlane.xlu0 %777
    %779 = vadd.xlane.f32.xlu0 %v457
    %v780 = vpop.xlane.xlu0 %779
    %781 = vadd.xlane.f32.xlu0 %v458
    %v782 = vpop.xlane.xlu0 %781
    %783 = vadd.xlane.f32.xlu0 %v459
    %v784 = vpop.xlane.xlu0 %783
    %785 = vadd.xlane.f32.xlu0 %v460
    %v786 = vpop.xlane.xlu0 %785
    %787 = vadd.xlane.f32.xlu0 %v461
    %v788 = vpop.xlane.xlu0 %787
    %789 = vadd.xlane.f32.xlu0 %v462
    %v790 = vpop.xlane.xlu0 %789
    %791 = vadd.xlane.f32.xlu0 %v463
    %v792 = vpop.xlane.xlu0 %791
    %793 = vadd.xlane.f32.xlu0 %v464
    %v794 = vpop.xlane.xlu0 %793
    %795 = vadd.xlane.f32.xlu0 %v465
    %v796 = vpop.xlane.xlu0 %795
    %797 = vadd.xlane.f32.xlu0 %v466
    %v798 = vpop.xlane.xlu0 %797
    %799 = vadd.xlane.f32.xlu0 %v467
    %v800 = vpop.xlane.xlu0 %799
    %801 = vadd.xlane.f32.xlu0 %v468
    %v802 = vpop.xlane.xlu0 %801
    %803 = vadd.xlane.f32.xlu0 %v469
    %v804 = vpop.xlane.xlu0 %803
    %805 = vadd.xlane.f32.xlu0 %v470
    %v806 = vpop.xlane.xlu0 %805
    %807 = vadd.xlane.f32.xlu0 %v471
    %v808 = vpop.xlane.xlu0 %807
    %809 = vadd.xlane.f32.xlu0 %v472
    %v810 = vpop.xlane.xlu0 %809
    %811 = vadd.xlane.f32.xlu0 %v473
    %v812 = vpop.xlane.xlu0 %811
    %813 = vadd.xlane.f32.xlu0 %v474
    %v814 = vpop.xlane.xlu0 %813
    %815 = vadd.xlane.f32.xlu0 %v475
    %v816 = vpop.xlane.xlu0 %815
    %817 = vadd.xlane.f32.xlu0 %v476
    %v818 = vpop.xlane.xlu0 %817
    %819 = vadd.xlane.f32.xlu0 %v477
    %v820 = vpop.xlane.xlu0 %819
    %821 = vadd.xlane.f32.xlu0 %v478
    %v822 = vpop.xlane.xlu0 %821
    %823 = vadd.xlane.f32.xlu0 %v479
    %v824 = vpop.xlane.xlu0 %823
    %825 = vadd.xlane.f32.xlu0 %v480
    %v826 = vpop.xlane.xlu0 %825
    %827 = vadd.xlane.f32.xlu0 %v481
    %v828 = vpop.xlane.xlu0 %827
    %829 = vadd.xlane.f32.xlu0 %v482
    %v830 = vpop.xlane.xlu0 %829
    %831 = vadd.xlane.f32.xlu0 %v483
    %v832 = vpop.xlane.xlu0 %831
    %833 = vadd.xlane.f32.xlu0 %v484
    %v834 = vpop.xlane.xlu0 %833
    %835 = vadd.xlane.f32.xlu0 %v485
    %v836 = vpop.xlane.xlu0 %835
    %837 = vadd.xlane.f32.xlu0 %v486
    %v838 = vpop.xlane.xlu0 %837
    %839 = vadd.xlane.f32.xlu0 %v487
    %v840 = vpop.xlane.xlu0 %839
    %841 = vadd.xlane.f32.xlu0 %v488
    %v842 = vpop.xlane.xlu0 %841
    %843 = vadd.xlane.f32.xlu0 %v489
    %v844 = vpop.xlane.xlu0 %843
    %845 = vadd.xlane.f32.xlu0 %v490
    %v846 = vpop.xlane.xlu0 %845
    %847 = vadd.xlane.f32.xlu0 %v491
    %v848 = vpop.xlane.xlu0 %847
    %849 = vadd.xlane.f32.xlu0 %v492
    %v850 = vpop.xlane.xlu0 %849
    %851 = vadd.xlane.f32.xlu0 %v493
    %v852 = vpop.xlane.xlu0 %851
    %853 = vadd.xlane.f32.xlu0 %v494
    %v854 = vpop.xlane.xlu0 %853
    %855 = vadd.xlane.f32.xlu0 %v495
    %v856 = vpop.xlane.xlu0 %855
    %857 = vadd.xlane.f32.xlu0 %v496
    %v858 = vpop.xlane.xlu0 %857
    %859 = vadd.xlane.f32.xlu0 %v497
    %v860 = vpop.xlane.xlu0 %859
    %861 = vadd.xlane.f32.xlu0 %v498
    %v862 = vpop.xlane.xlu0 %861
    %863 = vadd.xlane.f32.xlu0 %v499
    %v864 = vpop.xlane.xlu0 %863
    %865 = vadd.xlane.f32.xlu0 %v500
    %v866 = vpop.xlane.xlu0 %865
    %867 = vadd.xlane.f32.xlu0 %v501
    %v868 = vpop.xlane.xlu0 %867
    %869 = vadd.xlane.f32.xlu0 %v502
    %v870 = vpop.xlane.xlu0 %869
    %871 = vadd.xlane.f32.xlu0 %v503
    %v872 = vpop.xlane.xlu0 %871
    %873 = vadd.xlane.f32.xlu0 %v504
    %v874 = vpop.xlane.xlu0 %873
    %875 = vadd.xlane.f32.xlu0 %v505
    %v876 = vpop.xlane.xlu0 %875
    %877 = vadd.xlane.f32.xlu0 %v506
    %v878 = vpop.xlane.xlu0 %877
    %879 = vadd.xlane.f32.xlu0 %v507
    %v880 = vpop.xlane.xlu0 %879
    %881 = vadd.xlane.f32.xlu0 %v508
    %v882 = vpop.xlane.xlu0 %881
    %883 = vadd.xlane.f32.xlu0 %v509
    %v884 = vpop.xlane.xlu0 %883
    %885 = vadd.xlane.f32.xlu0 %v510
    %v886 = vpop.xlane.xlu0 %885
    %887 = vadd.xlane.f32.xlu0 %v511
    %v888 = vpop.xlane.xlu0 %887
    %889 = vadd.xlane.f32.xlu0 %v512
    %v890 = vpop.xlane.xlu0 %889
    %891 = vadd.xlane.f32.xlu0 %v513
    %v892 = vpop.xlane.xlu0 %891
    %893 = vadd.xlane.f32.xlu0 %v514
    %v894 = vpop.xlane.xlu0 %893
    %895 = vadd.xlane.f32.xlu0 %v515
    %v896 = vpop.xlane.xlu0 %895
    %897 = vadd.xlane.f32.xlu0 %v516
    %v898 = vpop.xlane.xlu0 %897
    %899 = vadd.xlane.f32.xlu0 %v517
    %v900 = vpop.xlane.xlu0 %899
    %901 = vadd.xlane.f32.xlu0 %v518
    %v902 = vpop.xlane.xlu0 %901
    %903 = vadd.xlane.f32.xlu0 %v519
    %v904 = vpop.xlane.xlu0 %903
    %905 = vadd.xlane.f32.xlu0 %v520
    %v906 = vpop.xlane.xlu0 %905
    %907 = vadd.xlane.f32.xlu0 %v521
    %v908 = vpop.xlane.xlu0 %907
    %909 = vadd.xlane.f32.xlu0 %v522
    %v910 = vpop.xlane.xlu0 %909
    %911 = vadd.xlane.f32.xlu0 %v523
    %v912 = vpop.xlane.xlu0 %911
    %913 = vadd.xlane.f32.xlu0 %v524
    %v914 = vpop.xlane.xlu0 %913
    %915 = vadd.xlane.f32.xlu0 %v525
    %v916 = vpop.xlane.xlu0 %915
    %917 = vadd.xlane.f32.xlu0 %v526
    %v918 = vpop.xlane.xlu0 %917
    %919 = vadd.xlane.f32.xlu0 %v527
    %v920 = vpop.xlane.xlu0 %919
    %921 = vadd.xlane.f32.xlu0 %v528
    %v922 = vpop.xlane.xlu0 %921
    %923 = vadd.xlane.f32.xlu0 %v529
    %v924 = vpop.xlane.xlu0 %923
    %925 = vadd.xlane.f32.xlu0 %v530
    %v926 = vpop.xlane.xlu0 %925
    %927 = vadd.xlane.f32.xlu0 %v531
    %v928 = vpop.xlane.xlu0 %927
    %929 = vadd.xlane.f32.xlu0 %v532
    %v930 = vpop.xlane.xlu0 %929
    %931 = vadd.xlane.f32.xlu0 %v533
    %v932 = vpop.xlane.xlu0 %931
    %933 = vadd.xlane.f32.xlu0 %v534
    %v934 = vpop.xlane.xlu0 %933
    %935 = vadd.xlane.f32.xlu0 %v535
    %v936 = vpop.xlane.xlu0 %935
    %937 = vadd.xlane.f32.xlu0 %v536
    %v938 = vpop.xlane.xlu0 %937
    %939 = vadd.xlane.f32.xlu0 %v537
    %v940 = vpop.xlane.xlu0 %939
    %941 = vadd.xlane.f32.xlu0 %v538
    %v942 = vpop.xlane.xlu0 %941
    %943 = vadd.xlane.f32.xlu0 %v539
    %v944 = vpop.xlane.xlu0 %943
    %945 = vadd.xlane.f32.xlu0 %v540
    %v946 = vpop.xlane.xlu0 %945
    %947 = vadd.xlane.f32.xlu0 %v541
    %v948 = vpop.xlane.xlu0 %947
    %949 = vadd.xlane.f32.xlu0 %v542
    %v950 = vpop.xlane.xlu0 %949
    %951 = vadd.xlane.f32.xlu0 %v543
    %v952 = vpop.xlane.xlu0 %951
    %953 = vadd.xlane.f32.xlu0 %v544
    %v954 = vpop.xlane.xlu0 %953
    %955 = vadd.xlane.f32.xlu0 %v545
    %v956 = vpop.xlane.xlu0 %955
    %957 = vadd.xlane.f32.xlu0 %v546
    %v958 = vpop.xlane.xlu0 %957
    %959 = vadd.xlane.f32.xlu0 %v547
    %v960 = vpop.xlane.xlu0 %959
    %961 = vadd.xlane.f32.xlu0 %v548
    %v962 = vpop.xlane.xlu0 %961
    %963 = vadd.xlane.f32.xlu0 %v549
    %v964 = vpop.xlane.xlu0 %963
    %965 = vadd.xlane.f32.xlu0 %v550
    %v966 = vpop.xlane.xlu0 %965
    %967 = vadd.xlane.f32.xlu0 %v551
    %v968 = vpop.xlane.xlu0 %967
    %969 = vadd.xlane.f32.xlu0 %v552
    %v970 = vpop.xlane.xlu0 %969
    %971 = vadd.xlane.f32.xlu0 %v553
    %v972 = vpop.xlane.xlu0 %971
    %973 = vadd.xlane.f32.xlu0 %v554
    %v974 = vpop.xlane.xlu0 %973
    %975 = vadd.xlane.f32.xlu0 %v555
    %v976 = vpop.xlane.xlu0 %975
    %977 = vadd.xlane.f32.xlu0 %v556
    %v978 = vpop.xlane.xlu0 %977
    %979 = vadd.xlane.f32.xlu0 %v557
    %v980 = vpop.xlane.xlu0 %979
    %981 = vadd.xlane.f32.xlu0 %v558
    %v982 = vpop.xlane.xlu0 %981
    %983 = vadd.xlane.f32.xlu0 %v559
    %v984 = vpop.xlane.xlu0 %983
    %985 = vadd.xlane.f32.xlu0 %v560
    %v986 = vpop.xlane.xlu0 %985
    %987 = vadd.xlane.f32.xlu0 %v561
    %v988 = vpop.xlane.xlu0 %987
    %989 = vadd.xlane.f32.xlu0 %v562
    %v990 = vpop.xlane.xlu0 %989
    %991 = vadd.xlane.f32.xlu0 %v563
    %v992 = vpop.xlane.xlu0 %991
    %993 = vadd.xlane.f32.xlu0 %v564
    %v994 = vpop.xlane.xlu0 %993
    %995 = vadd.xlane.f32.xlu0 %v565
    %v996 = vpop.xlane.xlu0 %995
    %997 = vadd.xlane.f32.xlu0 %v566
    %v998 = vpop.xlane.xlu0 %997
    %999 = vadd.xlane.f32.xlu0 %v567
    %v1000 = vpop.xlane.xlu0 %999
    %1001 = vadd.xlane.f32.xlu0 %v568
    %v1002 = vpop.xlane.xlu0 %1001
    %1003 = vadd.xlane.f32.xlu0 %v569
    %v1004 = vpop.xlane.xlu0 %1003
    %1005 = vadd.xlane.f32.xlu0 %v570
    %v1006 = vpop.xlane.xlu0 %1005
    %1007 = vadd.xlane.f32.xlu0 %v571
    %v1008 = vpop.xlane.xlu0 %1007
    %1009 = vadd.xlane.f32.xlu0 %v572
    %v1010 = vpop.xlane.xlu0 %1009
    %1011 = vadd.xlane.f32.xlu0 %v573
    %v1012 = vpop.xlane.xlu0 %1011
    %1013 = vadd.xlane.f32.xlu0 %v574
    %v1014 = vpop.xlane.xlu0 %1013
    %1015 = vadd.xlane.f32.xlu0 %v575
    %v1016 = vpop.xlane.xlu0 %1015
    %1017 = vadd.xlane.f32.xlu0 %v576
    %v1018 = vpop.xlane.xlu0 %1017
    %1019 = vadd.xlane.f32.xlu0 %v577
    %v1020 = vpop.xlane.xlu0 %1019
    %1021 = vadd.xlane.f32.xlu0 %v578
    %v1022 = vpop.xlane.xlu0 %1021
    %1023 = vadd.xlane.f32.xlu0 %v579
    %v1024 = vpop.xlane.xlu0 %1023
    %1025 = vadd.xlane.f32.xlu0 %v580
    %v1026 = vpop.xlane.xlu0 %1025
    %1027 = vadd.xlane.f32.xlu0 %v581
    %v1028 = vpop.xlane.xlu0 %1027
    %1029 = vadd.xlane.f32.xlu0 %v582
    %v1030 = vpop.xlane.xlu0 %1029
    %1031 = vadd.xlane.f32.xlu0 %v583
    %v1032 = vpop.xlane.xlu0 %1031
    %1033 = vadd.xlane.f32.xlu0 %v584
    %v1034 = vpop.xlane.xlu0 %1033
    %1035 = vadd.xlane.f32.xlu0 %v585
    %v1036 = vpop.xlane.xlu0 %1035
    %1037 = vadd.xlane.f32.xlu0 %v586
    %v1038 = vpop.xlane.xlu0 %1037
    %1039 = vadd.xlane.f32.xlu0 %v587
    %v1040 = vpop.xlane.xlu0 %1039
    %1041 = vadd.xlane.f32.xlu0 %v588
    %v1042 = vpop.xlane.xlu0 %1041
    %1043 = vadd.xlane.f32.xlu0 %v589
    %v1044 = vpop.xlane.xlu0 %1043
    %1045 = vadd.xlane.f32.xlu0 %v590
    %v1046 = vpop.xlane.xlu0 %1045
    %1047 = vadd.xlane.f32.xlu0 %v591
    %v1048 = vpop.xlane.xlu0 %1047
    %1049 = vadd.xlane.f32.xlu0 %v592
    %v1050 = vpop.xlane.xlu0 %1049
    %1051 = vadd.xlane.f32.xlu0 %v593
    %v1052 = vpop.xlane.xlu0 %1051
    %1053 = vadd.xlane.f32.xlu0 %v594
    %v1054 = vpop.xlane.xlu0 %1053
    %1055 = vadd.xlane.f32.xlu0 %v595
    %v1056 = vpop.xlane.xlu0 %1055
    %1057 = vadd.xlane.f32.xlu0 %v596
    %v1058 = vpop.xlane.xlu0 %1057
    %1059 = vadd.xlane.f32.xlu0 %v597
    %v1060 = vpop.xlane.xlu0 %1059
    %1061 = vadd.xlane.f32.xlu0 %v598
    %v1062 = vpop.xlane.xlu0 %1061
    %1063 = vadd.xlane.f32.xlu0 %v599
    %v1064 = vpop.xlane.xlu0 %1063
    %1065 = vadd.xlane.f32.xlu0 %v600
    %v1066 = vpop.xlane.xlu0 %1065
    %1067 = vadd.xlane.f32.xlu0 %v601
    %v1068 = vpop.xlane.xlu0 %1067
    %1069 = vadd.xlane.f32.xlu0 %v602
    %v1070 = vpop.xlane.xlu0 %1069
    %1071 = vadd.xlane.f32.xlu0 %v603
    %v1072 = vpop.xlane.xlu0 %1071
    %1073 = vadd.xlane.f32.xlu0 %v604
    %v1074 = vpop.xlane.xlu0 %1073
    %1075 = vadd.xlane.f32.xlu0 %v605
    %v1076 = vpop.xlane.xlu0 %1075
    %1077 = vadd.xlane.f32.xlu0 %v606
    %v1078 = vpop.xlane.xlu0 %1077
    %1079 = vadd.xlane.f32.xlu0 %v607
    %v1080 = vpop.xlane.xlu0 %1079
    %1081 = vadd.xlane.f32.xlu0 %v608
    %v1082 = vpop.xlane.xlu0 %1081
    %1083 = vadd.xlane.f32.xlu0 %v609
    %v1084 = vpop.xlane.xlu0 %1083
    %1085 = vadd.xlane.f32.xlu0 %v610
    %v1086 = vpop.xlane.xlu0 %1085
    %1087 = vadd.xlane.f32.xlu0 %v611
    %v1088 = vpop.xlane.xlu0 %1087
    %1089 = vadd.xlane.f32.xlu0 %v612
    %v1090 = vpop.xlane.xlu0 %1089
    %1091 = vadd.xlane.f32.xlu0 %v613
    %v1092 = vpop.xlane.xlu0 %1091
    %1093 = vadd.xlane.f32.xlu0 %v614
    %v1094 = vpop.xlane.xlu0 %1093
    %1095 = vadd.xlane.f32.xlu0 %v615
    %v1096 = vpop.xlane.xlu0 %1095
    %1097 = vadd.xlane.f32.xlu0 %v616
    %v1098 = vpop.xlane.xlu0 %1097
    %1099 = vadd.xlane.f32.xlu0 %v617
    %v1100 = vpop.xlane.xlu0 %1099
    %1101 = vadd.xlane.f32.xlu0 %v618
    %v1102 = vpop.xlane.xlu0 %1101
    %1103 = vadd.xlane.f32.xlu0 %v619
    %v1104 = vpop.xlane.xlu0 %1103
    %1105 = vadd.xlane.f32.xlu0 %v620
    %v1106 = vpop.xlane.xlu0 %1105
    %1107 = vadd.xlane.f32.xlu0 %v621
    %v1108 = vpop.xlane.xlu0 %1107
    %1109 = vadd.xlane.f32.xlu0 %v622
    %v1110 = vpop.xlane.xlu0 %1109
    %1111 = vadd.xlane.f32.xlu0 %v623
    %v1112 = vpop.xlane.xlu0 %1111
    %1113 = vadd.xlane.f32.xlu0 %v624
    %v1114 = vpop.xlane.xlu0 %1113
    %1115 = vadd.xlane.f32.xlu0 %v625
    %v1116 = vpop.xlane.xlu0 %1115
    %1117 = vadd.xlane.f32.xlu0 %v626
    %v1118 = vpop.xlane.xlu0 %1117
    %1119 = vadd.xlane.f32.xlu0 %v627
    %v1120 = vpop.xlane.xlu0 %1119
    %1121 = vadd.xlane.f32.xlu0 %v628
    %v1122 = vpop.xlane.xlu0 %1121
    %1123 = vadd.xlane.f32.xlu0 %v629
    %v1124 = vpop.xlane.xlu0 %1123
    %1125 = vadd.xlane.f32.xlu0 %v630
    %v1126 = vpop.xlane.xlu0 %1125
    %1127 = vadd.xlane.f32.xlu0 %v631
    %v1128 = vpop.xlane.xlu0 %1127
    %1129 = vadd.xlane.f32.xlu0 %v632
    %v1130 = vpop.xlane.xlu0 %1129
    %1131 = vadd.xlane.f32.xlu0 %v633
    %v1132 = vpop.xlane.xlu0 %1131
    %1133 = vadd.xlane.f32.xlu0 %v634
    %v1134 = vpop.xlane.xlu0 %1133
    %1135 = vadd.xlane.f32.xlu0 %v635
    %v1136 = vpop.xlane.xlu0 %1135
    %1137 = vadd.xlane.f32.xlu0 %v636
    %v1138 = vpop.xlane.xlu0 %1137
    %1139 = vadd.xlane.f32.xlu0 %v637
    %v1140 = vpop.xlane.xlu0 %1139
    %1141 = vadd.xlane.f32.xlu0 %v638
    %v1142 = vpop.xlane.xlu0 %1141
    %1143 = vadd.xlane.f32.xlu0 %v639
    %v1144 = vpop.xlane.xlu0 %1143
    %1145 = vadd.xlane.f32.xlu0 %v640
    %v1146 = vpop.xlane.xlu0 %1145
    %1147 = vadd.xlane.f32.xlu0 %v641
    %v1148 = vpop.xlane.xlu0 %1147
    %1149 = vadd.xlane.f32.xlu0 %v642
    %v1150 = vpop.xlane.xlu0 %1149
    %1151 = vadd.xlane.f32.xlu0 %v643
    %v1152 = vpop.xlane.xlu0 %1151
    %1153 = vadd.xlane.f32.xlu0 %v644
    %v1154 = vpop.xlane.xlu0 %1153
    %1155 = vadd.xlane.f32.xlu0 %v645
    %v1156 = vpop.xlane.xlu0 %1155
    %1157 = vadd.xlane.f32.xlu0 %v646
    %v1158 = vpop.xlane.xlu0 %1157
    %v1415 = vlaneseq
    %v1416 = vand.u32 %v1415, 127
    %v1417 = vperm.slane %v648, %v1416
    %v1418 = vadd.s32 %v1416, 4294967288
    %v1419 = vperm.slane %v650, %v1418
    %vm1420 = vcmask 130112
    %v1421 = vsel %vm1420, %v1419, %v1417
    %v1422 = vadd.s32 %v1416, 4294967280
    %v1423 = vperm.slane %v652, %v1422
    %vm1424 = vcmask 195712
    %v1425 = vsel %vm1424, %v1423, %v1421
    %v1426 = vadd.s32 %v1416, 4294967272
    %v1427 = vperm.slane %v654, %v1426
    %vm1428 = vcmask 261312
    %v1429 = vsel %vm1428, %v1427, %v1425
    %v1430 = vadd.s32 %v1416, 4294967264
    %v1431 = vperm.slane %v656, %v1430
    %vm1432 = vcmask 326912
    %v1433 = vsel %vm1432, %v1431, %v1429
    %v1434 = vadd.s32 %v1416, 4294967256
    %v1435 = vperm.slane %v658, %v1434
    %vm1436 = vcmask 392512
    %v1437 = vsel %vm1436, %v1435, %v1433
    %v1438 = vadd.s32 %v1416, 4294967248
    %v1439 = vperm.slane %v660, %v1438
    %vm1440 = vcmask 458112
    %v1441 = vsel %vm1440, %v1439, %v1437
    %v1442 = vadd.s32 %v1416, 4294967240
    %v1443 = vperm.slane %v662, %v1442
    %vm1444 = vcmask 523712
    %v1445 = vsel %vm1444, %v1443, %v1441
    %v1446 = vadd.s32 %v1416, 4294967232
    %v1447 = vperm.slane %v664, %v1446
    %vm1448 = vcmask 589312
    %v1449 = vsel %vm1448, %v1447, %v1445
    %v1450 = vadd.s32 %v1416, 4294967224
    %v1451 = vperm.slane %v666, %v1450
    %vm1452 = vcmask 654912
    %v1453 = vsel %vm1452, %v1451, %v1449
    %v1454 = vadd.s32 %v1416, 4294967216
    %v1455 = vperm.slane %v668, %v1454
    %vm1456 = vcmask 720512
    %v1457 = vsel %vm1456, %v1455, %v1453
    %v1458 = vadd.s32 %v1416, 4294967208
    %v1459 = vperm.slane %v670, %v1458
    %vm1460 = vcmask 786112
    %v1461 = vsel %vm1460, %v1459, %v1457
    %v1462 = vadd.s32 %v1416, 4294967200
    %v1463 = vperm.slane %v672, %v1462
    %vm1464 = vcmask 851712
    %v1465 = vsel %vm1464, %v1463, %v1461
    %v1466 = vadd.s32 %v1416, 4294967192
    %v1467 = vperm.slane %v674, %v1466
    %vm1468 = vcmask 917312
    %v1469 = vsel %vm1468, %v1467, %v1465
    %v1470 = vadd.s32 %v1416, 4294967184
    %v1471 = vperm.slane %v676, %v1470
    %vm1472 = vcmask 982912
    %v1473 = vsel %vm1472, %v1471, %v1469
    %v1474 = vadd.s32 %v1416, 4294967176
    %v1475 = vperm.slane %v678, %v1474
    %vm1476 = vcmask 1048512
    %v1477 = vsel %vm1476, %v1475, %v1473
    %v1478 = vperm.slane %v680, %v1416
    %v1479 = vperm.slane %v682, %v1418
    %v1480 = vsel %vm1420, %v1479, %v1478
    %v1481 = vperm.slane %v684, %v1422
    %v1482 = vsel %vm1424, %v1481, %v1480
    %v1483 = vperm.slane %v686, %v1426
    %v1484 = vsel %vm1428, %v1483, %v1482
    %v1485 = vperm.slane %v688, %v1430
    %v1486 = vsel %vm1432, %v1485, %v1484
    %v1487 = vperm.slane %v690, %v1434
    %v1488 = vsel %vm1436, %v1487, %v1486
    %v1489 = vperm.slane %v692, %v1438
    %v1490 = vsel %vm1440, %v1489, %v1488
    %v1491 = vperm.slane %v694, %v1442
    %v1492 = vsel %vm1444, %v1491, %v1490
    %v1493 = vperm.slane %v696, %v1446
    %v1494 = vsel %vm1448, %v1493, %v1492
    %v1495 = vperm.slane %v698, %v1450
    %v1496 = vsel %vm1452, %v1495, %v1494
    %v1497 = vperm.slane %v700, %v1454
    %v1498 = vsel %vm1456, %v1497, %v1496
    %v1499 = vperm.slane %v702, %v1458
    %v1500 = vsel %vm1460, %v1499, %v1498
    %v1501 = vperm.slane %v704, %v1462
    %v1502 = vsel %vm1464, %v1501, %v1500
    %v1503 = vperm.slane %v706, %v1466
    %v1504 = vsel %vm1468, %v1503, %v1502
    %v1505 = vperm.slane %v708, %v1470
    %v1506 = vsel %vm1472, %v1505, %v1504
    %v1507 = vperm.slane %v710, %v1474
    %v1508 = vsel %vm1476, %v1507, %v1506
    %v1509 = vperm.slane %v712, %v1416
    %v1510 = vperm.slane %v714, %v1418
    %v1511 = vsel %vm1420, %v1510, %v1509
    %v1512 = vperm.slane %v716, %v1422
    %v1513 = vsel %vm1424, %v1512, %v1511
    %v1514 = vperm.slane %v718, %v1426
    %v1515 = vsel %vm1428, %v1514, %v1513
    %v1516 = vperm.slane %v720, %v1430
    %v1517 = vsel %vm1432, %v1516, %v1515
    %v1518 = vperm.slane %v722, %v1434
    %v1519 = vsel %vm1436, %v1518, %v1517
    %v1520 = vperm.slane %v724, %v1438
    %v1521 = vsel %vm1440, %v1520, %v1519
    %v1522 = vperm.slane %v726, %v1442
    %v1523 = vsel %vm1444, %v1522, %v1521
    %v1524 = vperm.slane %v728, %v1446
    %v1525 = vsel %vm1448, %v1524, %v1523
    %v1526 = vperm.slane %v730, %v1450
    %v1527 = vsel %vm1452, %v1526, %v1525
    %v1528 = vperm.slane %v732, %v1454
    %v1529 = vsel %vm1456, %v1528, %v1527
    %v1530 = vperm.slane %v734, %v1458
    %v1531 = vsel %vm1460, %v1530, %v1529
    %v1532 = vperm.slane %v736, %v1462
    %v1533 = vsel %vm1464, %v1532, %v1531
    %v1534 = vperm.slane %v738, %v1466
    %v1535 = vsel %vm1468, %v1534, %v1533
    %v1536 = vperm.slane %v740, %v1470
    %v1537 = vsel %vm1472, %v1536, %v1535
    %v1538 = vperm.slane %v742, %v1474
    %v1539 = vsel %vm1476, %v1538, %v1537
    %v1540 = vperm.slane %v744, %v1416
    %v1541 = vperm.slane %v746, %v1418
    %v1542 = vsel %vm1420, %v1541, %v1540
    %v1543 = vperm.slane %v748, %v1422
    %v1544 = vsel %vm1424, %v1543, %v1542
    %v1545 = vperm.slane %v750, %v1426
    %v1546 = vsel %vm1428, %v1545, %v1544
    %v1547 = vperm.slane %v752, %v1430
    %v1548 = vsel %vm1432, %v1547, %v1546
    %v1549 = vperm.slane %v754, %v1434
    %v1550 = vsel %vm1436, %v1549, %v1548
    %v1551 = vperm.slane %v756, %v1438
    %v1552 = vsel %vm1440, %v1551, %v1550
    %v1553 = vperm.slane %v758, %v1442
    %v1554 = vsel %vm1444, %v1553, %v1552
    %v1555 = vperm.slane %v760, %v1446
    %v1556 = vsel %vm1448, %v1555, %v1554
    %v1557 = vperm.slane %v762, %v1450
    %v1558 = vsel %vm1452, %v1557, %v1556
    %v1559 = vperm.slane %v764, %v1454
    %v1560 = vsel %vm1456, %v1559, %v1558
    %v1561 = vperm.slane %v766, %v1458
    %v1562 = vsel %vm1460, %v1561, %v1560
    %v1563 = vperm.slane %v768, %v1462
    %v1564 = vsel %vm1464, %v1563, %v1562
    %v1565 = vperm.slane %v770, %v1466
    %v1566 = vsel %vm1468, %v1565, %v1564
    %v1567 = vperm.slane %v772, %v1470
    %v1568 = vsel %vm1472, %v1567, %v1566
    %v1569 = vperm.slane %v774, %v1474
    %v1570 = vsel %vm1476, %v1569, %v1568
    %v1571 = vperm.slane %v776, %v1416
    %v1572 = vperm.slane %v778, %v1418
    %v1573 = vsel %vm1420, %v1572, %v1571
    %v1574 = vperm.slane %v780, %v1422
    %v1575 = vsel %vm1424, %v1574, %v1573
    %v1576 = vperm.slane %v782, %v1426
    %v1577 = vsel %vm1428, %v1576, %v1575
    %v1578 = vperm.slane %v784, %v1430
    %v1579 = vsel %vm1432, %v1578, %v1577
    %v1580 = vperm.slane %v786, %v1434
    %v1581 = vsel %vm1436, %v1580, %v1579
    %v1582 = vperm.slane %v788, %v1438
    %v1583 = vsel %vm1440, %v1582, %v1581
    %v1584 = vperm.slane %v790, %v1442
    %v1585 = vsel %vm1444, %v1584, %v1583
    %v1586 = vperm.slane %v792, %v1446
    %v1587 = vsel %vm1448, %v1586, %v1585
    %v1588 = vperm.slane %v794, %v1450
    %v1589 = vsel %vm1452, %v1588, %v1587
    %v1590 = vperm.slane %v796, %v1454
    %v1591 = vsel %vm1456, %v1590, %v1589
    %v1592 = vperm.slane %v798, %v1458
    %v1593 = vsel %vm1460, %v1592, %v1591
    %v1594 = vperm.slane %v800, %v1462
    %v1595 = vsel %vm1464, %v1594, %v1593
    %v1596 = vperm.slane %v802, %v1466
    %v1597 = vsel %vm1468, %v1596, %v1595
    %v1598 = vperm.slane %v804, %v1470
    %v1599 = vsel %vm1472, %v1598, %v1597
    %v1600 = vperm.slane %v806, %v1474
    %v1601 = vsel %vm1476, %v1600, %v1599
    %v1602 = vperm.slane %v808, %v1416
    %v1603 = vperm.slane %v810, %v1418
    %v1604 = vsel %vm1420, %v1603, %v1602
    %v1605 = vperm.slane %v812, %v1422
    %v1606 = vsel %vm1424, %v1605, %v1604
    %v1607 = vperm.slane %v814, %v1426
    %v1608 = vsel %vm1428, %v1607, %v1606
    %v1609 = vperm.slane %v816, %v1430
    %v1610 = vsel %vm1432, %v1609, %v1608
    %v1611 = vperm.slane %v818, %v1434
    %v1612 = vsel %vm1436, %v1611, %v1610
    %v1613 = vperm.slane %v820, %v1438
    %v1614 = vsel %vm1440, %v1613, %v1612
    %v1615 = vperm.slane %v822, %v1442
    %v1616 = vsel %vm1444, %v1615, %v1614
    %v1617 = vperm.slane %v824, %v1446
    %v1618 = vsel %vm1448, %v1617, %v1616
    %v1619 = vperm.slane %v826, %v1450
    %v1620 = vsel %vm1452, %v1619, %v1618
    %v1621 = vperm.slane %v828, %v1454
    %v1622 = vsel %vm1456, %v1621, %v1620
    %v1623 = vperm.slane %v830, %v1458
    %v1624 = vsel %vm1460, %v1623, %v1622
    %v1625 = vperm.slane %v832, %v1462
    %v1626 = vsel %vm1464, %v1625, %v1624
    %v1627 = vperm.slane %v834, %v1466
    %v1628 = vsel %vm1468, %v1627, %v1626
    %v1629 = vperm.slane %v836, %v1470
    %v1630 = vsel %vm1472, %v1629, %v1628
    %v1631 = vperm.slane %v838, %v1474
    %v1632 = vsel %vm1476, %v1631, %v1630
    %v1633 = vperm.slane %v840, %v1416
    %v1634 = vperm.slane %v842, %v1418
    %v1635 = vsel %vm1420, %v1634, %v1633
    %v1636 = vperm.slane %v844, %v1422
    %v1637 = vsel %vm1424, %v1636, %v1635
    %v1638 = vperm.slane %v846, %v1426
    %v1639 = vsel %vm1428, %v1638, %v1637
    %v1640 = vperm.slane %v848, %v1430
    %v1641 = vsel %vm1432, %v1640, %v1639
    %v1642 = vperm.slane %v850, %v1434
    %v1643 = vsel %vm1436, %v1642, %v1641
    %v1644 = vperm.slane %v852, %v1438
    %v1645 = vsel %vm1440, %v1644, %v1643
    %v1646 = vperm.slane %v854, %v1442
    %v1647 = vsel %vm1444, %v1646, %v1645
    %v1648 = vperm.slane %v856, %v1446
    %v1649 = vsel %vm1448, %v1648, %v1647
    %v1650 = vperm.slane %v858, %v1450
    %v1651 = vsel %vm1452, %v1650, %v1649
    %v1652 = vperm.slane %v860, %v1454
    %v1653 = vsel %vm1456, %v1652, %v1651
    %v1654 = vperm.slane %v862, %v1458
    %v1655 = vsel %vm1460, %v1654, %v1653
    %v1656 = vperm.slane %v864, %v1462
    %v1657 = vsel %vm1464, %v1656, %v1655
    %v1658 = vperm.slane %v866, %v1466
    %v1659 = vsel %vm1468, %v1658, %v1657
    %v1660 = vperm.slane %v868, %v1470
    %v1661 = vsel %vm1472, %v1660, %v1659
    %v1662 = vperm.slane %v870, %v1474
    %v1663 = vsel %vm1476, %v1662, %v1661
    %v1664 = vperm.slane %v872, %v1416
    %v1665 = vperm.slane %v874, %v1418
    %v1666 = vsel %vm1420, %v1665, %v1664
    %v1667 = vperm.slane %v876, %v1422
    %v1668 = vsel %vm1424, %v1667, %v1666
    %v1669 = vperm.slane %v878, %v1426
    %v1670 = vsel %vm1428, %v1669, %v1668
    %v1671 = vperm.slane %v880, %v1430
    %v1672 = vsel %vm1432, %v1671, %v1670
    %v1673 = vperm.slane %v882, %v1434
    %v1674 = vsel %vm1436, %v1673, %v1672
    %v1675 = vperm.slane %v884, %v1438
    %v1676 = vsel %vm1440, %v1675, %v1674
    %v1677 = vperm.slane %v886, %v1442
    %v1678 = vsel %vm1444, %v1677, %v1676
    %v1679 = vperm.slane %v888, %v1446
    %v1680 = vsel %vm1448, %v1679, %v1678
    %v1681 = vperm.slane %v890, %v1450
    %v1682 = vsel %vm1452, %v1681, %v1680
    %v1683 = vperm.slane %v892, %v1454
    %v1684 = vsel %vm1456, %v1683, %v1682
    %v1685 = vperm.slane %v894, %v1458
    %v1686 = vsel %vm1460, %v1685, %v1684
    %v1687 = vperm.slane %v896, %v1462
    %v1688 = vsel %vm1464, %v1687, %v1686
    %v1689 = vperm.slane %v898, %v1466
    %v1690 = vsel %vm1468, %v1689, %v1688
    %v1691 = vperm.slane %v900, %v1470
    %v1692 = vsel %vm1472, %v1691, %v1690
    %v1693 = vperm.slane %v902, %v1474
    %v1694 = vsel %vm1476, %v1693, %v1692
    %v1695 = vperm.slane %v904, %v1416
    %v1696 = vperm.slane %v906, %v1418
    %v1697 = vsel %vm1420, %v1696, %v1695
    %v1698 = vperm.slane %v908, %v1422
    %v1699 = vsel %vm1424, %v1698, %v1697
    %v1700 = vperm.slane %v910, %v1426
    %v1701 = vsel %vm1428, %v1700, %v1699
    %v1702 = vperm.slane %v912, %v1430
    %v1703 = vsel %vm1432, %v1702, %v1701
    %v1704 = vperm.slane %v914, %v1434
    %v1705 = vsel %vm1436, %v1704, %v1703
    %v1706 = vperm.slane %v916, %v1438
    %v1707 = vsel %vm1440, %v1706, %v1705
    %v1708 = vperm.slane %v918, %v1442
    %v1709 = vsel %vm1444, %v1708, %v1707
    %v1710 = vperm.slane %v920, %v1446
    %v1711 = vsel %vm1448, %v1710, %v1709
    %v1712 = vperm.slane %v922, %v1450
    %v1713 = vsel %vm1452, %v1712, %v1711
    %v1714 = vperm.slane %v924, %v1454
    %v1715 = vsel %vm1456, %v1714, %v1713
    %v1716 = vperm.slane %v926, %v1458
    %v1717 = vsel %vm1460, %v1716, %v1715
    %v1718 = vperm.slane %v928, %v1462
    %v1719 = vsel %vm1464, %v1718, %v1717
    %v1720 = vperm.slane %v930, %v1466
    %v1721 = vsel %vm1468, %v1720, %v1719
    %v1722 = vperm.slane %v932, %v1470
    %v1723 = vsel %vm1472, %v1722, %v1721
    %v1724 = vperm.slane %v934, %v1474
    %v1725 = vsel %vm1476, %v1724, %v1723
    %v1726 = vperm.slane %v936, %v1416
    %v1727 = vperm.slane %v938, %v1418
    %v1728 = vsel %vm1420, %v1727, %v1726
    %v1729 = vperm.slane %v940, %v1422
    %v1730 = vsel %vm1424, %v1729, %v1728
    %v1731 = vperm.slane %v942, %v1426
    %v1732 = vsel %vm1428, %v1731, %v1730
    %v1733 = vperm.slane %v944, %v1430
    %v1734 = vsel %vm1432, %v1733, %v1732
    %v1735 = vperm.slane %v946, %v1434
    %v1736 = vsel %vm1436, %v1735, %v1734
    %v1737 = vperm.slane %v948, %v1438
    %v1738 = vsel %vm1440, %v1737, %v1736
    %v1739 = vperm.slane %v950, %v1442
    %v1740 = vsel %vm1444, %v1739, %v1738
    %v1741 = vperm.slane %v952, %v1446
    %v1742 = vsel %vm1448, %v1741, %v1740
    %v1743 = vperm.slane %v954, %v1450
    %v1744 = vsel %vm1452, %v1743, %v1742
    %v1745 = vperm.slane %v956, %v1454
    %v1746 = vsel %vm1456, %v1745, %v1744
    %v1747 = vperm.slane %v958, %v1458
    %v1748 = vsel %vm1460, %v1747, %v1746
    %v1749 = vperm.slane %v960, %v1462
    %v1750 = vsel %vm1464, %v1749, %v1748
    %v1751 = vperm.slane %v962, %v1466
    %v1752 = vsel %vm1468, %v1751, %v1750
    %v1753 = vperm.slane %v964, %v1470
    %v1754 = vsel %vm1472, %v1753, %v1752
    %v1755 = vperm.slane %v966, %v1474
    %v1756 = vsel %vm1476, %v1755, %v1754
    %v1757 = vperm.slane %v968, %v1416
    %v1758 = vperm.slane %v970, %v1418
    %v1759 = vsel %vm1420, %v1758, %v1757
    %v1760 = vperm.slane %v972, %v1422
    %v1761 = vsel %vm1424, %v1760, %v1759
    %v1762 = vperm.slane %v974, %v1426
    %v1763 = vsel %vm1428, %v1762, %v1761
    %v1764 = vperm.slane %v976, %v1430
    %v1765 = vsel %vm1432, %v1764, %v1763
    %v1766 = vperm.slane %v978, %v1434
    %v1767 = vsel %vm1436, %v1766, %v1765
    %v1768 = vperm.slane %v980, %v1438
    %v1769 = vsel %vm1440, %v1768, %v1767
    %v1770 = vperm.slane %v982, %v1442
    %v1771 = vsel %vm1444, %v1770, %v1769
    %v1772 = vperm.slane %v984, %v1446
    %v1773 = vsel %vm1448, %v1772, %v1771
    %v1774 = vperm.slane %v986, %v1450
    %v1775 = vsel %vm1452, %v1774, %v1773
    %v1776 = vperm.slane %v988, %v1454
    %v1777 = vsel %vm1456, %v1776, %v1775
    %v1778 = vperm.slane %v990, %v1458
    %v1779 = vsel %vm1460, %v1778, %v1777
    %v1780 = vperm.slane %v992, %v1462
    %v1781 = vsel %vm1464, %v1780, %v1779
    %v1782 = vperm.slane %v994, %v1466
    %v1783 = vsel %vm1468, %v1782, %v1781
    %v1784 = vperm.slane %v996, %v1470
    %v1785 = vsel %vm1472, %v1784, %v1783
    %v1786 = vperm.slane %v998, %v1474
    %v1787 = vsel %vm1476, %v1786, %v1785
    %v1788 = vperm.slane %v1000, %v1416
    %v1789 = vperm.slane %v1002, %v1418
    %v1790 = vsel %vm1420, %v1789, %v1788
    %v1791 = vperm.slane %v1004, %v1422
    %v1792 = vsel %vm1424, %v1791, %v1790
    %v1793 = vperm.slane %v1006, %v1426
    %v1794 = vsel %vm1428, %v1793, %v1792
    %v1795 = vperm.slane %v1008, %v1430
    %v1796 = vsel %vm1432, %v1795, %v1794
    %v1797 = vperm.slane %v1010, %v1434
    %v1798 = vsel %vm1436, %v1797, %v1796
    %v1799 = vperm.slane %v1012, %v1438
    %v1800 = vsel %vm1440, %v1799, %v1798
    %v1801 = vperm.slane %v1014, %v1442
    %v1802 = vsel %vm1444, %v1801, %v1800
    %v1803 = vperm.slane %v1016, %v1446
    %v1804 = vsel %vm1448, %v1803, %v1802
    %v1805 = vperm.slane %v1018, %v1450
    %v1806 = vsel %vm1452, %v1805, %v1804
    %v1807 = vperm.slane %v1020, %v1454
    %v1808 = vsel %vm1456, %v1807, %v1806
    %v1809 = vperm.slane %v1022, %v1458
    %v1810 = vsel %vm1460, %v1809, %v1808
    %v1811 = vperm.slane %v1024, %v1462
    %v1812 = vsel %vm1464, %v1811, %v1810
    %v1813 = vperm.slane %v1026, %v1466
    %v1814 = vsel %vm1468, %v1813, %v1812
    %v1815 = vperm.slane %v1028, %v1470
    %v1816 = vsel %vm1472, %v1815, %v1814
    %v1817 = vperm.slane %v1030, %v1474
    %v1818 = vsel %vm1476, %v1817, %v1816
    %v1819 = vperm.slane %v1032, %v1416
    %v1820 = vperm.slane %v1034, %v1418
    %v1821 = vsel %vm1420, %v1820, %v1819
    %v1822 = vperm.slane %v1036, %v1422
    %v1823 = vsel %vm1424, %v1822, %v1821
    %v1824 = vperm.slane %v1038, %v1426
    %v1825 = vsel %vm1428, %v1824, %v1823
    %v1826 = vperm.slane %v1040, %v1430
    %v1827 = vsel %vm1432, %v1826, %v1825
    %v1828 = vperm.slane %v1042, %v1434
    %v1829 = vsel %vm1436, %v1828, %v1827
    %v1830 = vperm.slane %v1044, %v1438
    %v1831 = vsel %vm1440, %v1830, %v1829
    %v1832 = vperm.slane %v1046, %v1442
    %v1833 = vsel %vm1444, %v1832, %v1831
    %v1834 = vperm.slane %v1048, %v1446
    %v1835 = vsel %vm1448, %v1834, %v1833
    %v1836 = vperm.slane %v1050, %v1450
    %v1837 = vsel %vm1452, %v1836, %v1835
    %v1838 = vperm.slane %v1052, %v1454
    %v1839 = vsel %vm1456, %v1838, %v1837
    %v1840 = vperm.slane %v1054, %v1458
    %v1841 = vsel %vm1460, %v1840, %v1839
    %v1842 = vperm.slane %v1056, %v1462
    %v1843 = vsel %vm1464, %v1842, %v1841
    %v1844 = vperm.slane %v1058, %v1466
    %v1845 = vsel %vm1468, %v1844, %v1843
    %v1846 = vperm.slane %v1060, %v1470
    %v1847 = vsel %vm1472, %v1846, %v1845
    %v1848 = vperm.slane %v1062, %v1474
    %v1849 = vsel %vm1476, %v1848, %v1847
    %v1850 = vperm.slane %v1064, %v1416
    %v1851 = vperm.slane %v1066, %v1418
    %v1852 = vsel %vm1420, %v1851, %v1850
    %v1853 = vperm.slane %v1068, %v1422
    %v1854 = vsel %vm1424, %v1853, %v1852
    %v1855 = vperm.slane %v1070, %v1426
    %v1856 = vsel %vm1428, %v1855, %v1854
    %v1857 = vperm.slane %v1072, %v1430
    %v1858 = vsel %vm1432, %v1857, %v1856
    %v1859 = vperm.slane %v1074, %v1434
    %v1860 = vsel %vm1436, %v1859, %v1858
    %v1861 = vperm.slane %v1076, %v1438
    %v1862 = vsel %vm1440, %v1861, %v1860
    %v1863 = vperm.slane %v1078, %v1442
    %v1864 = vsel %vm1444, %v1863, %v1862
    %v1865 = vperm.slane %v1080, %v1446
    %v1866 = vsel %vm1448, %v1865, %v1864
    %v1867 = vperm.slane %v1082, %v1450
    %v1868 = vsel %vm1452, %v1867, %v1866
    %v1869 = vperm.slane %v1084, %v1454
    %v1870 = vsel %vm1456, %v1869, %v1868
    %v1871 = vperm.slane %v1086, %v1458
    %v1872 = vsel %vm1460, %v1871, %v1870
    %v1873 = vperm.slane %v1088, %v1462
    %v1874 = vsel %vm1464, %v1873, %v1872
    %v1875 = vperm.slane %v1090, %v1466
    %v1876 = vsel %vm1468, %v1875, %v1874
    %v1877 = vperm.slane %v1092, %v1470
    %v1878 = vsel %vm1472, %v1877, %v1876
    %v1879 = vperm.slane %v1094, %v1474
    %v1880 = vsel %vm1476, %v1879, %v1878
    %v1881 = vperm.slane %v1096, %v1416
    %v1882 = vperm.slane %v1098, %v1418
    %v1883 = vsel %vm1420, %v1882, %v1881
    %v1884 = vperm.slane %v1100, %v1422
    %v1885 = vsel %vm1424, %v1884, %v1883
    %v1886 = vperm.slane %v1102, %v1426
    %v1887 = vsel %vm1428, %v1886, %v1885
    %v1888 = vperm.slane %v1104, %v1430
    %v1889 = vsel %vm1432, %v1888, %v1887
    %v1890 = vperm.slane %v1106, %v1434
    %v1891 = vsel %vm1436, %v1890, %v1889
    %v1892 = vperm.slane %v1108, %v1438
    %v1893 = vsel %vm1440, %v1892, %v1891
    %v1894 = vperm.slane %v1110, %v1442
    %v1895 = vsel %vm1444, %v1894, %v1893
    %v1896 = vperm.slane %v1112, %v1446
    %v1897 = vsel %vm1448, %v1896, %v1895
    %v1898 = vperm.slane %v1114, %v1450
    %v1899 = vsel %vm1452, %v1898, %v1897
    %v1900 = vperm.slane %v1116, %v1454
    %v1901 = vsel %vm1456, %v1900, %v1899
    %v1902 = vperm.slane %v1118, %v1458
    %v1903 = vsel %vm1460, %v1902, %v1901
    %v1904 = vperm.slane %v1120, %v1462
    %v1905 = vsel %vm1464, %v1904, %v1903
    %v1906 = vperm.slane %v1122, %v1466
    %v1907 = vsel %vm1468, %v1906, %v1905
    %v1908 = vperm.slane %v1124, %v1470
    %v1909 = vsel %vm1472, %v1908, %v1907
    %v1910 = vperm.slane %v1126, %v1474
    %v1911 = vsel %vm1476, %v1910, %v1909
    %v1912 = vperm.slane %v1128, %v1416
    %v1913 = vperm.slane %v1130, %v1418
    %v1914 = vsel %vm1420, %v1913, %v1912
    %v1915 = vperm.slane %v1132, %v1422
    %v1916 = vsel %vm1424, %v1915, %v1914
    %v1917 = vperm.slane %v1134, %v1426
    %v1918 = vsel %vm1428, %v1917, %v1916
    %v1919 = vperm.slane %v1136, %v1430
    %v1920 = vsel %vm1432, %v1919, %v1918
    %v1921 = vperm.slane %v1138, %v1434
    %v1922 = vsel %vm1436, %v1921, %v1920
    %v1923 = vperm.slane %v1140, %v1438
    %v1924 = vsel %vm1440, %v1923, %v1922
    %v1925 = vperm.slane %v1142, %v1442
    %v1926 = vsel %vm1444, %v1925, %v1924
    %v1927 = vperm.slane %v1144, %v1446
    %v1928 = vsel %vm1448, %v1927, %v1926
    %v1929 = vperm.slane %v1146, %v1450
    %v1930 = vsel %vm1452, %v1929, %v1928
    %v1931 = vperm.slane %v1148, %v1454
    %v1932 = vsel %vm1456, %v1931, %v1930
    %v1933 = vperm.slane %v1150, %v1458
    %v1934 = vsel %vm1460, %v1933, %v1932
    %v1935 = vperm.slane %v1152, %v1462
    %v1936 = vsel %vm1464, %v1935, %v1934
    %v1937 = vperm.slane %v1154, %v1466
    %v1938 = vsel %vm1468, %v1937, %v1936
    %v1939 = vperm.slane %v1156, %v1470
    %v1940 = vsel %vm1472, %v1939, %v1938
    %v1941 = vperm.slane %v1158, %v1474
    %v1942 = vsel %vm1476, %v1941, %v1940
    %vm1943 = vcmask 1041409
    %v1944 = vsel %vm1943, %v1539, %v1477
    %vm1945 = vcmask 1042434
    %v1946 = vsel %vm1945, %v1601, %v1944
    %vm1947 = vcmask 1043459
    %v1948 = vsel %vm1947, %v1663, %v1946
    %vm1949 = vcmask 1044484
    %v1950 = vsel %vm1949, %v1725, %v1948
    %vm1951 = vcmask 1045509
    %v1952 = vsel %vm1951, %v1787, %v1950
    %vm1953 = vcmask 1046534
    %v1954 = vsel %vm1953, %v1849, %v1952
    %vm1955 = vcmask 1047559
    %v1956 = vsel %vm1955, %v1911, %v1954
    %v1957 = vsel %vm1943, %v1570, %v1508
    %v1958 = vsel %vm1945, %v1632, %v1957
    %v1959 = vsel %vm1947, %v1694, %v1958
    %v1960 = vsel %vm1949, %v1756, %v1959
    %v1961 = vsel %vm1951, %v1818, %v1960
    %v1962 = vsel %vm1953, %v1880, %v1961
    %v1963 = vsel %vm1955, %v1942, %v1962
    %1966 = vst [vmem:[#allocation8] sm:$0xff] %v1956
    %1967 = vst [vmem:[#allocation8 + $0x8] sm:$0xff] %v1963
    // Predicated region
    $region26: #{tpu_custom_call.1} parent=1 // pred_check
      _
    $region27: #{tpu_custom_call.1} parent=1 // pred_check_branch
      %1969 = sbr.rel (0) target = $region29
    $region28: #{tpu_custom_call.1} parent=1 // pred_region
      %1971 = vsyncadd [#allocation4], 0
      %s1973 = sshll.u32 [#allocation8], 4
      %s1974 = int_to_ptr.vmem [resolvable:$true] %s1973
      %s1975 = sshll.u32 %s3, 4
      %s1976 = int_to_ptr.hbm [resolvable:$true] %s1975
      %1978 = dma.vmem_to_hbm [thread:$0]  %s1974, 256, %s1976, [#allocation4]
    $region29: #{tpu_custom_call.1} parent=1 // pred_fallthru
      _
    // Predicated region
    $region30: #{tpu_custom_call.1} parent=1 // pred_check
      _
    $region31: #{tpu_custom_call.1} parent=1 // pred_check_branch
      %1980 = sbr.rel (0) target = $region33
    $region32: #{tpu_custom_call.1} parent=1 // pred_region
      %1982 = dma.done [#allocation4], 256
    $region33: #{tpu_custom_call.1} parent=1 // pred_fallthru
      _
    %1983 = vsyncpa [#allocation3], 1
    %1984 = vsyncpa [#allocation6], 1
    %1985 = vsyncpa [#allocation4], 1

</llo_original>
